<compile_context>
chip_gen: v7x
topology: tpu7x:2x2x1
jax: 0.10.0
libtpu: 0.0.40
codegen_flags: <defaults>
</compile_context>

<pallas_src>
import jax
import jax.numpy as jnp
from jax.experimental import pallas as pl
from jax.experimental.pallas import tpu as pltpu


def encoder_kernel(len_ref, embf_ref, embb_ref,
                   wih_f_ref, wih_b_ref, bx_f_ref, bx_b_ref,
                   whh_f_ref, whh_b_ref, bhn_f_ref, bhn_b_ref,
                   wfc_f_ref, wfc_b_ref, bfc_ref,
                   outf_ref, outb_ref, hid_ref,
                   gxf_ref, gxb_ref, hf_ref, hb_ref):
    g = pl.program_id(0)
    nc = pl.num_programs(0)
    cT, B, H = outf_ref.shape               # chunk_T, padded batch, hidden

    # ---- init recurrence carries on the first grid step ----
    @pl.when(g == 0)
    def _():
        hf_ref[...] = jnp.zeros_like(hf_ref)
        hb_ref[...] = jnp.zeros_like(hb_ref)

    # ---- per-chunk input projections: one MXU matmul per direction ----
    # bf16 operands, f32 accumulation; r/z thirds of b_hh already folded into bx_*.
    gxf_ref[...] = (jnp.dot(embf_ref[...], wih_f_ref[...],
                            preferred_element_type=jnp.float32) + bx_f_ref[...])
    gxb_ref[...] = (jnp.dot(embb_ref[...], wih_b_ref[...],
                            preferred_element_type=jnp.float32) + bx_b_ref[...])

    # ---- hoisted loop invariants (no per-iteration broadcast_in_dim) ----
    lengths = len_ref[...]                               # (B, 1) int32
    whh_f = whh_f_ref[...]
    whh_b = whh_b_ref[...]
    bhn_f = jnp.broadcast_to(bhn_f_ref[...], (B, H))
    bhn_b = jnp.broadcast_to(bhn_b_ref[...], (B, H))

    t0_f = g * cT                                        # global t of fwd chunk start
    t0_b = (nc - 1 - g) * cT                             # global t of bwd chunk start

    def cell(gx, h, w_hh, b_hn):
        """PyTorch GRU cell, gate order (r, z, n). gx = x@W_ih + b_ih (+ b_hh[r,z])."""
        gh = jnp.dot(h, w_hh, preferred_element_type=jnp.float32)
        rz = jax.nn.sigmoid(gx[:, :2 * H] + gh[:, :2 * H])     # merged r/z sigmoid
        r = rz[:, :H]
        z = rz[:, H:]
        n = jnp.tanh(gx[:, 2 * H:] + r * (gh[:, 2 * H:] + b_hn))
        return (1.0 - z) * n + z * h

    # ---- fused fwd/bwd recurrence over this chunk ----
    def body(i, carry):
        h_f, h_b = carry
        ib = cT - 1 - i

        # forward direction at global t = t0_f + i
        rf = pl.multiple_of(i * B, 8)
        hf_new = cell(gxf_ref[pl.ds(rf, B), :], h_f, whh_f, bhn_f)
        m_f = (t0_f + i) < lengths                       # (B, 1) bool
        outf_ref[i, :, :] = jnp.where(m_f, hf_new, 0.0).astype(outf_ref.dtype)
        h_f = jnp.where(m_f, hf_new, h_f)                # freeze past length

        # backward direction at global t = t0_b + ib
        rb = pl.multiple_of(ib * B, 8)
        hb_new = cell(gxb_ref[pl.ds(rb, B), :], h_b, whh_b, bhn_b)
        m_b = (t0_b + ib) < lengths
        outb_ref[ib, :, :] = jnp.where(m_b, hb_new, 0.0).astype(outb_ref.dtype)
        h_b = jnp.where(m_b, hb_new, h_b)                # stays 0 until t < length

        return h_f, h_b

    h_f, h_b = jax.lax.fori_loop(0, cT, body, (hf_ref[...], hb_ref[...]),
                                 unroll=min(cT, 8))
    hf_ref[...] = h_f
    hb_ref[...] = h_b

    # ---- hid = tanh(cat[h_f, h_b] @ W_fc + b_fc) on the last grid step ----
    @pl.when(g == nc - 1)
    def _():
        hid_ref[...] = jnp.tanh(
            jnp.dot(h_f.astype(wfc_f_ref.dtype), wfc_f_ref[...],
                    preferred_element_type=jnp.float32)
            + jnp.dot(h_b.astype(wfc_b_ref.dtype), wfc_b_ref[...],
                      preferred_element_type=jnp.float32)
            + bfc_ref[...])


def prepare_encoder_params(params):
    """One-time weight plumbing (hoisted out of encoder_forward)."""
    H = params["w_hh_f"].shape[0]
    f32, bf16 = jnp.float32, jnp.bfloat16

    def fold_bias(b_ih, b_hh):
        # fold r/z thirds of b_hh into the input-side bias; keep the n-gate hidden
        # bias separate (it must stay inside r * (W_hn h + b_hn)).
        return (b_ih + jnp.concatenate(
            [b_hh[:, :2 * H], jnp.zeros((1, H), f32)], axis=1)).astype(f32)

    return {
        "H": H,
        "E": params["w_ih_f"].shape[0],
        "D": params["w_fc"].shape[1],
        "embedding": params["embedding"].astype(bf16),
        "w_ih_f": params["w_ih_f"].astype(bf16),
        "w_ih_b": params["w_ih_b"].astype(bf16),
        "bx_f": fold_bias(params["b_ih_f"], params["b_hh_f"]),
        "bx_b": fold_bias(params["b_ih_b"], params["b_hh_b"]),
        "w_hh_f": params["w_hh_f"].astype(f32),
        "w_hh_b": params["w_hh_b"].astype(f32),
        "bhn_f": params["b_hh_f"][:, 2 * H:].astype(f32),
        "bhn_b": params["b_hh_b"][:, 2 * H:].astype(f32),
        "w_fc_f": params["w_fc"][:H].astype(bf16),
        "w_fc_b": params["w_fc"][H:].astype(bf16),
        "b_fc": params["b_fc"].astype(f32),
    }


def encoder_forward(prep, x, lengths, *, chunk_t=8):
    """x: (B, T) int32 token ids; lengths: python sequence of ints (len B, descending)."""
    B, T = x.shape
    H, E, D = prep["H"], prep["E"], prep["D"]

    # pad batch to a sublane multiple (8) and time to a chunk multiple
    B_pad = -(-B // 8) * 8
    T_pad = -(-T // chunk_t) * chunk_t
    nc = T_pad // chunk_t
    cTB = chunk_t * B_pad

    x_p = jnp.zeros((B_pad, T_pad), jnp.int32).at[:B, :T].set(x)
    len_p = jnp.zeros((B_pad, 1), jnp.int32).at[:B, 0].set(
        jnp.asarray(lengths, dtype=jnp.int32))

    # embedding gather directly in time-major flattened order (row = t*B_pad + b)
    # TODO(synk): nn.Dropout is treated as identity (eval / inference semantics).
    ids_tm = x_p.T.reshape(T_pad * B_pad)
    emb2d = prep["embedding"][ids_tm]                     # (T_pad*B_pad, E) bf16

    def full_spec(shape):
        return pl.BlockSpec(shape, lambda g, _n=len(shape): (0,) * _n)

    emb_f_spec = pl.BlockSpec((cTB, E), lambda g: (g, 0))
    emb_b_spec = pl.BlockSpec((cTB, E), lambda g: (nc - 1 - g, 0))
    out_f_spec = pl.BlockSpec((chunk_t, B_pad, H), lambda g: (g, 0, 0))
    out_b_spec = pl.BlockSpec((chunk_t, B_pad, H), lambda g: (nc - 1 - g, 0, 0))

    # VMEM budget derived from the chip (headroom for double-buffered chunk specs)
    try:
        vmem_cap = pltpu.get_tpu_info().vmem_capacity_bytes
    except Exception:
        vmem_cap = 64 * 1024 * 1024
    vmem_limit = min(int(vmem_cap * 0.75), 100 * 1024 * 1024)

    out_f, out_b, hid = pl.pallas_call(
        encoder_kernel,
        out_shape=(
            jax.ShapeDtypeStruct((T_pad, B_pad, H), jnp.float32),   # fwd stream
            jax.ShapeDtypeStruct((T_pad, B_pad, H), jnp.float32),   # bwd stream
            jax.ShapeDtypeStruct((B_pad, D), jnp.float32),          # hid (pre-unsqueeze)
        ),
        grid_spec=pltpu.PrefetchScalarGridSpec(
            num_scalar_prefetch=0,
            grid=(nc,),
            in_specs=[
                full_spec((B_pad, 1)),                   # lengths
                emb_f_spec, emb_b_spec,                  # same emb array, two windows
                full_spec((E, 3 * H)), full_spec((E, 3 * H)),      # W_ih f/b
                full_spec((1, 3 * H)), full_spec((1, 3 * H)),      # bx f/b
                full_spec((H, 3 * H)), full_spec((H, 3 * H)),      # W_hh f/b
                full_spec((1, H)), full_spec((1, H)),              # b_hn f/b
                full_spec((H, D)), full_spec((H, D)),              # W_fc f/b
                full_spec((1, D)),                                  # b_fc
            ],
            out_specs=(out_f_spec, out_b_spec, full_spec((B_pad, D))),
            scratch_shapes=[
                pltpu.VMEM((cTB, 3 * H), jnp.float32),   # gx fwd (per chunk)
                pltpu.VMEM((cTB, 3 * H), jnp.float32),   # gx bwd (per chunk)
                pltpu.VMEM((B_pad, H), jnp.float32),     # h_f carry
                pltpu.VMEM((B_pad, H), jnp.float32),     # h_b carry
            ],
        ),
        compiler_params=pltpu.CompilerParams(
            dimension_semantics=("arbitrary",),
            vmem_limit_bytes=vmem_limit,
        ),
    )(len_p, emb2d, emb2d,
      prep["w_ih_f"], prep["w_ih_b"], prep["bx_f"], prep["bx_b"],
      prep["w_hh_f"], prep["w_hh_b"], prep["bhn_f"], prep["bhn_b"],
      prep["w_fc_f"], prep["w_fc_b"], prep["b_fc"])

    # TODO(synk): max(lengths) taken as a Python int; breaks if lengths are traced.
    max_len = int(max(lengths))
    out = jnp.concatenate([out_f[:max_len, :B], out_b[:max_len, :B]], axis=-1)
    out = jnp.transpose(out, (1, 0, 2))                   # (B, max_len, 2H) batch-first
    hid = jnp.expand_dims(hid[:B], 0)                     # (1, B, D)
    return out, hid


def init_params(key, vocab_size, embed_size, enc_hidden, dec_hidden):
    # NOTE: if loading real PyTorch weights, weight_ih/weight_hh are (3H,E)/(3H,H)
    # row-major and must be TRANSPOSED into the (E,3H)/(H,3H) layout used here,
    # keeping gate order (r, z, n).
    ks = jax.random.split(key, 12)
    k_gru = 1.0 / jnp.sqrt(enc_hidden)
    k_fc = 1.0 / jnp.sqrt(2 * enc_hidden)

    def u(k, shape, scale):
        return jax.random.uniform(k, shape, jnp.float32, -scale, scale)

    return {
        "embedding": jax.random.normal(ks[0], (vocab_size, embed_size), jnp.float32),
        "w_ih_f": u(ks[1], (embed_size, 3 * enc_hidden), k_gru),
        "w_hh_f": u(ks[2], (enc_hidden, 3 * enc_hidden), k_gru),
        "b_ih_f": u(ks[3], (1, 3 * enc_hidden), k_gru),
        "b_hh_f": u(ks[4], (1, 3 * enc_hidden), k_gru),
        "w_ih_b": u(ks[5], (embed_size, 3 * enc_hidden), k_gru),
        "w_hh_b": u(ks[6], (enc_hidden, 3 * enc_hidden), k_gru),
        "b_ih_b": u(ks[7], (1, 3 * enc_hidden), k_gru),
        "b_hh_b": u(ks[8], (1, 3 * enc_hidden), k_gru),
        "w_fc": u(ks[9], (2 * enc_hidden, dec_hidden), k_fc),
        "b_fc": u(ks[10], (1, dec_hidden), k_fc),
    }


def encoder_reference(params, x, lengths):
    """Pure-JAX reference with identical masking semantics (for validation)."""
    B, T = x.shape
    H = params["w_hh_f"].shape[0]
    emb = params["embedding"][x]                          # (B, T, E)
    lens = jnp.asarray(lengths, jnp.int32)

    def gru_cell(xw, h, w_hh, b_hh):
        gh = h @ w_hh + b_hh
        r = jax.nn.sigmoid(xw[:, :H] + gh[:, :H])
        z = jax.nn.sigmoid(xw[:, H:2 * H] + gh[:, H:2 * H])
        n = jnp.tanh(xw[:, 2 * H:] + r * gh[:, 2 * H:])
        return (1.0 - z) * n + z * h

    def run(w_ih, b_ih, w_hh, b_hh, ts):
        h = jnp.zeros((B, H), jnp.float32)
        outs = [None] * T
        for t in ts:
            xw = emb[:, t] @ w_ih + b_ih
            h_new = gru_cell(xw, h, w_hh, b_hh)
            m = (t < lens)[:, None]
            outs[t] = jnp.where(m, h_new, 0.0)
            h = jnp.where(m, h_new, h)
        return jnp.stack(outs, axis=1), h

    out_f, h_f = run(params["w_ih_f"], params["b_ih_f"],
                     params["w_hh_f"], params["b_hh_f"], range(T))
    out_b, h_b = run(params["w_ih_b"], params["b_ih_b"],
                     params["w_hh_b"], params["b_hh_b"], range(T - 1, -1, -1))
    max_len = int(max(lengths))
    out = jnp.concatenate([out_f, out_b], axis=-1)[:, :max_len]
    hid = jnp.tanh(jnp.concatenate([h_f, h_b], axis=-1) @ params["w_fc"]
                   + params["b_fc"])
    return out, hid[None]


if __name__ == "__main__":
    VOCAB, EMBED, ENC_H, DEC_H = 50, 32, 32, 32
    B, T = 2, 8

    key = jax.random.PRNGKey(0)
    k_param, k_tok = jax.random.split(key)
    params = init_params(k_param, VOCAB, EMBED, ENC_H, DEC_H)
    prep = prepare_encoder_params(params)

    x = jax.random.randint(k_tok, (B, T), 0, VOCAB, dtype=jnp.int32)
    lengths = (8, 5)                    # descending, as pack_padded_sequence expects

    out, hid = encoder_forward(prep, x, lengths, chunk_t=4)   # 2 grid chunks
    jax.block_until_ready((out, hid))

    assert out.shape == (B, max(lengths), 2 * ENC_H)
    assert hid.shape == (1, B, DEC_H)

    # validate against a pure-JAX reference run on the bf16-quantized matmul weights
    qparams = dict(params)
    for name in ("embedding", "w_ih_f", "w_ih_b", "w_fc"):
        qparams[name] = params[name].astype(jnp.bfloat16).astype(jnp.float32)
    out_exp, hid_exp = encoder_reference(qparams, x, lengths)
    assert float(jnp.max(jnp.abs(out - out_exp))) < 5e-2
    assert float(jnp.max(jnp.abs(hid - hid_exp))) < 5e-2

    print("KERNEL_OK")
</pallas_src>

<mosaic_0001>
module attributes {stable_mosaic.version = 11 : i64} {
  func.func @encoder_kernel(%arg0: i32, %arg1: memref<8x1xi32, #tpu.memory_space<vmem>>, %arg2: memref<32x32xbf16, #tpu.memory_space<vmem>>, %arg3: memref<32x32xbf16, #tpu.memory_space<vmem>>, %arg4: memref<32x96xbf16, #tpu.memory_space<vmem>>, %arg5: memref<32x96xbf16, #tpu.memory_space<vmem>>, %arg6: memref<1x96xf32, #tpu.memory_space<vmem>>, %arg7: memref<1x96xf32, #tpu.memory_space<vmem>>, %arg8: memref<32x96xf32, #tpu.memory_space<vmem>>, %arg9: memref<32x96xf32, #tpu.memory_space<vmem>>, %arg10: memref<1x32xf32, #tpu.memory_space<vmem>>, %arg11: memref<1x32xf32, #tpu.memory_space<vmem>>, %arg12: memref<32x32xbf16, #tpu.memory_space<vmem>>, %arg13: memref<32x32xbf16, #tpu.memory_space<vmem>>, %arg14: memref<1x32xf32, #tpu.memory_space<vmem>>, %arg15: memref<4x8x32xf32, #tpu.memory_space<vmem>>, %arg16: memref<4x8x32xf32, #tpu.memory_space<vmem>>, %arg17: memref<8x32xf32, #tpu.memory_space<vmem>>, %arg18: memref<32x96xf32, #tpu.memory_space<vmem>>, %arg19: memref<32x96xf32, #tpu.memory_space<vmem>>, %arg20: memref<8x32xf32, #tpu.memory_space<vmem>>, %arg21: memref<8x32xf32, #tpu.memory_space<vmem>>) attributes {dimension_semantics = [#tpu.dimension_semantics<arbitrary>], iteration_bounds = array<i64: 2>, scalar_prefetch = 0 : i64, scratch_operands = 4 : i64, tpu.core_type = #tpu.core_type<tc>, window_params = [{pipeline_mode = #tpu.pipeline_mode<synchronous>, transform_indices = @transform_0, window_bounds = array<i64: 8, 1>}, {transform_indices = @transform_1, window_bounds = array<i64: 32, 32>}, {transform_indices = @transform_2, window_bounds = array<i64: 32, 32>}, {pipeline_mode = #tpu.pipeline_mode<synchronous>, transform_indices = @transform_3, window_bounds = array<i64: 32, 96>}, {pipeline_mode = #tpu.pipeline_mode<synchronous>, transform_indices = @transform_4, window_bounds = array<i64: 32, 96>}, {pipeline_mode = #tpu.pipeline_mode<synchronous>, transform_indices = @transform_5, window_bounds = array<i64: 1, 96>}, {pipeline_mode = #tpu.pipeline_mode<synchronous>, transform_indices = @transform_6, window_bounds = array<i64: 1, 96>}, {pipeline_mode = #tpu.pipeline_mode<synchronous>, transform_indices = @transform_7, window_bounds = array<i64: 32, 96>}, {pipeline_mode = #tpu.pipeline_mode<synchronous>, transform_indices = @transform_8, window_bounds = array<i64: 32, 96>}, {pipeline_mode = #tpu.pipeline_mode<synchronous>, transform_indices = @transform_9, window_bounds = array<i64: 1, 32>}, {pipeline_mode = #tpu.pipeline_mode<synchronous>, transform_indices = @transform_10, window_bounds = array<i64: 1, 32>}, {pipeline_mode = #tpu.pipeline_mode<synchronous>, transform_indices = @transform_11, window_bounds = array<i64: 32, 32>}, {pipeline_mode = #tpu.pipeline_mode<synchronous>, transform_indices = @transform_12, window_bounds = array<i64: 32, 32>}, {pipeline_mode = #tpu.pipeline_mode<synchronous>, transform_indices = @transform_13, window_bounds = array<i64: 1, 32>}, {transform_indices = @transform_14, window_bounds = array<i64: 4, 8, 32>}, {transform_indices = @transform_15, window_bounds = array<i64: 4, 8, 32>}, {pipeline_mode = #tpu.pipeline_mode<synchronous>, transform_indices = @transform_16, window_bounds = array<i64: 8, 32>}]} {
    %c0_i32 = arith.constant 0 : i32
    %0 = arith.cmpi eq, %arg0, %c0_i32 : i32
    %1 = arith.extui %0 : i1 to i32
    %c0_i32_0 = arith.constant 0 : i32
    %2 = arith.cmpi ne, %1, %c0_i32_0 : i32
    scf.if %2 {
      %cst_108 = arith.constant 0.000000e+00 : f32
      %360 = vector.broadcast %cst_108 : f32 to vector<8x32xf32>
      %c0_109 = arith.constant 0 : index
      %c0_110 = arith.constant 0 : index
      %361 = vector.load %arg20[%c0_109, %c0_110] : memref<8x32xf32, #tpu.memory_space<vmem>>, vector<8x32xf32>
      tpu.vector_store %arg20[%c0_109, %c0_110], %360 {strides = array<i32>} : memref<8x32xf32, #tpu.memory_space<vmem>>, vector<8x32xf32>,
      %cst_111 = arith.constant 0.000000e+00 : f32
      %362 = vector.broadcast %cst_111 : f32 to vector<8x32xf32>
      %c0_112 = arith.constant 0 : index
      %c0_113 = arith.constant 0 : index
      %363 = vector.load %arg21[%c0_112, %c0_113] : memref<8x32xf32, #tpu.memory_space<vmem>>, vector<8x32xf32>
      tpu.vector_store %arg21[%c0_112, %c0_113], %362 {strides = array<i32>} : memref<8x32xf32, #tpu.memory_space<vmem>>, vector<8x32xf32>,
    } else {
    }
    %c0 = arith.constant 0 : index
    %c0_1 = arith.constant 0 : index
    %3 = vector.load %arg2[%c0, %c0_1] : memref<32x32xbf16, #tpu.memory_space<vmem>>, vector<32x32xbf16>
    %c0_2 = arith.constant 0 : index
    %c0_3 = arith.constant 0 : index
    %4 = vector.load %arg4[%c0_2, %c0_3] : memref<32x96xbf16, #tpu.memory_space<vmem>>, vector<32x96xbf16>
    %cst = arith.constant dense<0.000000e+00> : vector<32x96xf32>
    %5 = tpu.matmul %3, %4, %cst {dimension_numbers = #tpu.dot_dimension_numbers<[1], [0], [0], [1], [0, 0, 1, 1], [], []>} : vector<32x32xbf16>, vector<32x96xbf16>, vector<32x96xf32> -> vector<32x96xf32>
    %c0_4 = arith.constant 0 : index
    %c0_5 = arith.constant 0 : index
    %6 = vector.load %arg6[%c0_4, %c0_5] : memref<1x96xf32, #tpu.memory_space<vmem>>, vector<1x96xf32>
    %7 = vector.broadcast %6 : vector<1x96xf32> to vector<32x96xf32>
    %8 = arith.addf %5, %7 : vector<32x96xf32>
    %c0_6 = arith.constant 0 : index
    %c0_7 = arith.constant 0 : index
    %9 = vector.load %arg18[%c0_6, %c0_7] : memref<32x96xf32, #tpu.memory_space<vmem>>, vector<32x96xf32>
    tpu.vector_store %arg18[%c0_6, %c0_7], %8 {strides = array<i32>} : memref<32x96xf32, #tpu.memory_space<vmem>>, vector<32x96xf32>,
    %c0_8 = arith.constant 0 : index
    %c0_9 = arith.constant 0 : index
    %10 = vector.load %arg3[%c0_8, %c0_9] : memref<32x32xbf16, #tpu.memory_space<vmem>>, vector<32x32xbf16>
    %c0_10 = arith.constant 0 : index
    %c0_11 = arith.constant 0 : index
    %11 = vector.load %arg5[%c0_10, %c0_11] : memref<32x96xbf16, #tpu.memory_space<vmem>>, vector<32x96xbf16>
    %cst_12 = arith.constant dense<0.000000e+00> : vector<32x96xf32>
    %12 = tpu.matmul %10, %11, %cst_12 {dimension_numbers = #tpu.dot_dimension_numbers<[1], [0], [0], [1], [0, 0, 1, 1], [], []>} : vector<32x32xbf16>, vector<32x96xbf16>, vector<32x96xf32> -> vector<32x96xf32>
    %c0_13 = arith.constant 0 : index
    %c0_14 = arith.constant 0 : index
    %13 = vector.load %arg7[%c0_13, %c0_14] : memref<1x96xf32, #tpu.memory_space<vmem>>, vector<1x96xf32>
    %14 = vector.broadcast %13 : vector<1x96xf32> to vector<32x96xf32>
    %15 = arith.addf %12, %14 : vector<32x96xf32>
    %c0_15 = arith.constant 0 : index
    %c0_16 = arith.constant 0 : index
    %16 = vector.load %arg19[%c0_15, %c0_16] : memref<32x96xf32, #tpu.memory_space<vmem>>, vector<32x96xf32>
    tpu.vector_store %arg19[%c0_15, %c0_16], %15 {strides = array<i32>} : memref<32x96xf32, #tpu.memory_space<vmem>>, vector<32x96xf32>,
    %c0_17 = arith.constant 0 : index
    %c0_18 = arith.constant 0 : index
    %17 = vector.load %arg1[%c0_17, %c0_18] : memref<8x1xi32, #tpu.memory_space<vmem>>, vector<8x1xi32>
    %c0_19 = arith.constant 0 : index
    %c0_20 = arith.constant 0 : index
    %18 = vector.load %arg8[%c0_19, %c0_20] : memref<32x96xf32, #tpu.memory_space<vmem>>, vector<32x96xf32>
    %c0_21 = arith.constant 0 : index
    %c0_22 = arith.constant 0 : index
    %19 = vector.load %arg9[%c0_21, %c0_22] : memref<32x96xf32, #tpu.memory_space<vmem>>, vector<32x96xf32>
    %c0_23 = arith.constant 0 : index
    %c0_24 = arith.constant 0 : index
    %20 = vector.load %arg10[%c0_23, %c0_24] : memref<1x32xf32, #tpu.memory_space<vmem>>, vector<1x32xf32>
    %21 = vector.shape_cast %20 : vector<1x32xf32> to vector<1x32xf32>
    %22 = vector.broadcast %21 : vector<1x32xf32> to vector<8x32xf32>
    %c0_25 = arith.constant 0 : index
    %c0_26 = arith.constant 0 : index
    %23 = vector.load %arg11[%c0_25, %c0_26] : memref<1x32xf32, #tpu.memory_space<vmem>>, vector<1x32xf32>
    %24 = vector.shape_cast %23 : vector<1x32xf32> to vector<1x32xf32>
    %25 = vector.broadcast %24 : vector<1x32xf32> to vector<8x32xf32>
    %c4_i32 = arith.constant 4 : i32
    %26 = arith.muli %arg0, %c4_i32 : i32
    %c1_i32 = arith.constant 1 : i32
    %27 = arith.subi %c1_i32, %arg0 : i32
    %c4_i32_27 = arith.constant 4 : i32
    %28 = arith.muli %27, %c4_i32_27 : i32
    %c0_28 = arith.constant 0 : index
    %c0_29 = arith.constant 0 : index
    %29 = vector.load %arg20[%c0_28, %c0_29] : memref<8x32xf32, #tpu.memory_space<vmem>>, vector<8x32xf32>
    %c0_30 = arith.constant 0 : index
    %c0_31 = arith.constant 0 : index
    %30 = vector.load %arg21[%c0_30, %c0_31] : memref<8x32xf32, #tpu.memory_space<vmem>>, vector<8x32xf32>
    %c0_i32_32 = arith.constant 0 : i32
    %c3_i32 = arith.constant 3 : i32
    %31 = arith.subi %c3_i32, %c0_i32_32 : i32
    %c8_i32 = arith.constant 8 : i32
    %32 = arith.muli %c0_i32_32, %c8_i32 : i32
    %33 = tpu.assume_multiple %32, 8 : i32
    %34 = arith.index_cast %33 : i32 to index
    %c0_33 = arith.constant 0 : index
    %35 = vector.load %arg18[%34, %c0_33] : memref<32x96xf32, #tpu.memory_space<vmem>>, vector<8x96xf32>
    %cst_34 = arith.constant dense<0.000000e+00> : vector<8x96xf32>
    %36 = tpu.matmul %29, %18, %cst_34 {dimension_numbers = #tpu.dot_dimension_numbers<[1], [0], [0], [1], [0, 0, 1, 1], [], []>} : vector<8x32xf32>, vector<32x96xf32>, vector<8x96xf32> -> vector<8x96xf32>
    %37 = vector.extract_strided_slice %35 {offsets = [0, 0], sizes = [8, 64], strides = [1, 1]} : vector<8x96xf32> to vector<8x64xf32>
    %38 = vector.extract_strided_slice %36 {offsets = [0, 0], sizes = [8, 64], strides = [1, 1]} : vector<8x96xf32> to vector<8x64xf32>
    %39 = arith.addf %37, %38 : vector<8x64xf32>
    %40 = arith.negf %39 : vector<8x64xf32>
    %41 = math.exp %40 : vector<8x64xf32>
    %cst_35 = arith.constant 1.000000e+00 : f32
    %42 = vector.broadcast %cst_35 : f32 to vector<8x64xf32>
    %43 = arith.addf %42, %41 : vector<8x64xf32>
    %44 = arith.divf %42, %43 : vector<8x64xf32>
    %45 = vector.extract_strided_slice %44 {offsets = [0, 0], sizes = [8, 32], strides = [1, 1]} : vector<8x64xf32> to vector<8x32xf32>
    %46 = vector.extract_strided_slice %44 {offsets = [0, 32], sizes = [8, 32], strides = [1, 1]} : vector<8x64xf32> to vector<8x32xf32>
    %47 = vector.extract_strided_slice %35 {offsets = [0, 64], sizes = [8, 32], strides = [1, 1]} : vector<8x96xf32> to vector<8x32xf32>
    %48 = vector.extract_strided_slice %36 {offsets = [0, 64], sizes = [8, 32], strides = [1, 1]} : vector<8x96xf32> to vector<8x32xf32>
    %49 = arith.addf %48, %22 : vector<8x32xf32>
    %50 = arith.mulf %45, %49 : vector<8x32xf32>
    %51 = arith.addf %47, %50 : vector<8x32xf32>
    %52 = math.tanh %51 : vector<8x32xf32>
    %cst_36 = arith.constant 1.000000e+00 : f32
    %53 = vector.broadcast %cst_36 : f32 to vector<8x32xf32>
    %54 = arith.subf %53, %46 : vector<8x32xf32>
    %55 = arith.mulf %54, %52 : vector<8x32xf32>
    %56 = arith.mulf %46, %29 : vector<8x32xf32>
    %57 = arith.addf %55, %56 : vector<8x32xf32>
    %58 = arith.addi %26, %c0_i32_32 : i32
    %59 = vector.broadcast %58 : i32 to vector<8x1xi32>
    %60 = arith.cmpi slt, %59, %17 : vector<8x1xi32>
    %cst_37 = arith.constant 0.000000e+00 : f32
    %61 = vector.shape_cast %60 : vector<8x1xi1> to vector<8x1xi1>
    %62 = vector.broadcast %61 : vector<8x1xi1> to vector<8x32xi1>
    %63 = vector.broadcast %cst_37 : f32 to vector<8x32xf32>
    %64 = arith.select %62, %57, %63 : vector<8x32xi1>, vector<8x32xf32>
    %65 = arith.index_cast %c0_i32_32 : i32 to index
    %c0_38 = arith.constant 0 : index
    %c0_39 = arith.constant 0 : index
    %66 = vector.load %arg15[%65, %c0_38, %c0_39] : memref<4x8x32xf32, #tpu.memory_space<vmem>>, vector<1x8x32xf32>
    %67 = vector.shape_cast %66 : vector<1x8x32xf32> to vector<8x32xf32>
    %68 = vector.shape_cast %64 : vector<8x32xf32> to vector<1x8x32xf32>
    tpu.vector_store %arg15[%65, %c0_38, %c0_39], %68 {strides = array<i32>} : memref<4x8x32xf32, #tpu.memory_space<vmem>>, vector<1x8x32xf32>,
    %69 = vector.shape_cast %60 : vector<8x1xi1> to vector<8x1xi1>
    %70 = vector.broadcast %69 : vector<8x1xi1> to vector<8x32xi1>
    %71 = arith.select %70, %57, %29 : vector<8x32xi1>, vector<8x32xf32>
    %c8_i32_40 = arith.constant 8 : i32
    %72 = arith.muli %31, %c8_i32_40 : i32
    %73 = tpu.assume_multiple %72, 8 : i32
    %74 = arith.index_cast %73 : i32 to index
    %c0_41 = arith.constant 0 : index
    %75 = vector.load %arg19[%74, %c0_41] : memref<32x96xf32, #tpu.memory_space<vmem>>, vector<8x96xf32>
    %cst_42 = arith.constant dense<0.000000e+00> : vector<8x96xf32>
    %76 = tpu.matmul %30, %19, %cst_42 {dimension_numbers = #tpu.dot_dimension_numbers<[1], [0], [0], [1], [0, 0, 1, 1], [], []>} : vector<8x32xf32>, vector<32x96xf32>, vector<8x96xf32> -> vector<8x96xf32>
    %77 = vector.extract_strided_slice %75 {offsets = [0, 0], sizes = [8, 64], strides = [1, 1]} : vector<8x96xf32> to vector<8x64xf32>
    %78 = vector.extract_strided_slice %76 {offsets = [0, 0], sizes = [8, 64], strides = [1, 1]} : vector<8x96xf32> to vector<8x64xf32>
    %79 = arith.addf %77, %78 : vector<8x64xf32>
    %80 = arith.negf %79 : vector<8x64xf32>
    %81 = math.exp %80 : vector<8x64xf32>
    %cst_43 = arith.constant 1.000000e+00 : f32
    %82 = vector.broadcast %cst_43 : f32 to vector<8x64xf32>
    %83 = arith.addf %82, %81 : vector<8x64xf32>
    %84 = arith.divf %82, %83 : vector<8x64xf32>
    %85 = vector.extract_strided_slice %84 {offsets = [0, 0], sizes = [8, 32], strides = [1, 1]} : vector<8x64xf32> to vector<8x32xf32>
    %86 = vector.extract_strided_slice %84 {offsets = [0, 32], sizes = [8, 32], strides = [1, 1]} : vector<8x64xf32> to vector<8x32xf32>
    %87 = vector.extract_strided_slice %75 {offsets = [0, 64], sizes = [8, 32], strides = [1, 1]} : vector<8x96xf32> to vector<8x32xf32>
    %88 = vector.extract_strided_slice %76 {offsets = [0, 64], sizes = [8, 32], strides = [1, 1]} : vector<8x96xf32> to vector<8x32xf32>
    %89 = arith.addf %88, %25 : vector<8x32xf32>
    %90 = arith.mulf %85, %89 : vector<8x32xf32>
    %91 = arith.addf %87, %90 : vector<8x32xf32>
    %92 = math.tanh %91 : vector<8x32xf32>
    %cst_44 = arith.constant 1.000000e+00 : f32
    %93 = vector.broadcast %cst_44 : f32 to vector<8x32xf32>
    %94 = arith.subf %93, %86 : vector<8x32xf32>
    %95 = arith.mulf %94, %92 : vector<8x32xf32>
    %96 = arith.mulf %86, %30 : vector<8x32xf32>
    %97 = arith.addf %95, %96 : vector<8x32xf32>
    %98 = arith.addi %28, %31 : i32
    %99 = vector.broadcast %98 : i32 to vector<8x1xi32>
    %100 = arith.cmpi slt, %99, %17 : vector<8x1xi32>
    %cst_45 = arith.constant 0.000000e+00 : f32
    %101 = vector.shape_cast %100 : vector<8x1xi1> to vector<8x1xi1>
    %102 = vector.broadcast %101 : vector<8x1xi1> to vector<8x32xi1>
    %103 = vector.broadcast %cst_45 : f32 to vector<8x32xf32>
    %104 = arith.select %102, %97, %103 : vector<8x32xi1>, vector<8x32xf32>
    %105 = arith.index_cast %31 : i32 to index
    %c0_46 = arith.constant 0 : index
    %c0_47 = arith.constant 0 : index
    %106 = vector.load %arg16[%105, %c0_46, %c0_47] : memref<4x8x32xf32, #tpu.memory_space<vmem>>, vector<1x8x32xf32>
    %107 = vector.shape_cast %106 : vector<1x8x32xf32> to vector<8x32xf32>
    %108 = vector.shape_cast %104 : vector<8x32xf32> to vector<1x8x32xf32>
    tpu.vector_store %arg16[%105, %c0_46, %c0_47], %108 {strides = array<i32>} : memref<4x8x32xf32, #tpu.memory_space<vmem>>, vector<1x8x32xf32>,
    %109 = vector.shape_cast %100 : vector<8x1xi1> to vector<8x1xi1>
    %110 = vector.broadcast %109 : vector<8x1xi1> to vector<8x32xi1>
    %111 = arith.select %110, %97, %30 : vector<8x32xi1>, vector<8x32xf32>
    %c1_i32_48 = arith.constant 1 : i32
    %c3_i32_49 = arith.constant 3 : i32
    %112 = arith.subi %c3_i32_49, %c1_i32_48 : i32
    %c8_i32_50 = arith.constant 8 : i32
    %113 = arith.muli %c1_i32_48, %c8_i32_50 : i32
    %114 = tpu.assume_multiple %113, 8 : i32
    %115 = arith.index_cast %114 : i32 to index
    %c0_51 = arith.constant 0 : index
    %116 = vector.load %arg18[%115, %c0_51] : memref<32x96xf32, #tpu.memory_space<vmem>>, vector<8x96xf32>
    %cst_52 = arith.constant dense<0.000000e+00> : vector<8x96xf32>
    %117 = tpu.matmul %71, %18, %cst_52 {dimension_numbers = #tpu.dot_dimension_numbers<[1], [0], [0], [1], [0, 0, 1, 1], [], []>} : vector<8x32xf32>, vector<32x96xf32>, vector<8x96xf32> -> vector<8x96xf32>
    %118 = vector.extract_strided_slice %116 {offsets = [0, 0], sizes = [8, 64], strides = [1, 1]} : vector<8x96xf32> to vector<8x64xf32>
    %119 = vector.extract_strided_slice %117 {offsets = [0, 0], sizes = [8, 64], strides = [1, 1]} : vector<8x96xf32> to vector<8x64xf32>
    %120 = arith.addf %118, %119 : vector<8x64xf32>
    %121 = arith.negf %120 : vector<8x64xf32>
    %122 = math.exp %121 : vector<8x64xf32>
    %cst_53 = arith.constant 1.000000e+00 : f32
    %123 = vector.broadcast %cst_53 : f32 to vector<8x64xf32>
    %124 = arith.addf %123, %122 : vector<8x64xf32>
    %125 = arith.divf %123, %124 : vector<8x64xf32>
    %126 = vector.extract_strided_slice %125 {offsets = [0, 0], sizes = [8, 32], strides = [1, 1]} : vector<8x64xf32> to vector<8x32xf32>
    %127 = vector.extract_strided_slice %125 {offsets = [0, 32], sizes = [8, 32], strides = [1, 1]} : vector<8x64xf32> to vector<8x32xf32>
    %128 = vector.extract_strided_slice %116 {offsets = [0, 64], sizes = [8, 32], strides = [1, 1]} : vector<8x96xf32> to vector<8x32xf32>
    %129 = vector.extract_strided_slice %117 {offsets = [0, 64], sizes = [8, 32], strides = [1, 1]} : vector<8x96xf32> to vector<8x32xf32>
    %130 = arith.addf %129, %22 : vector<8x32xf32>
    %131 = arith.mulf %126, %130 : vector<8x32xf32>
    %132 = arith.addf %128, %131 : vector<8x32xf32>
    %133 = math.tanh %132 : vector<8x32xf32>
    %cst_54 = arith.constant 1.000000e+00 : f32
    %134 = vector.broadcast %cst_54 : f32 to vector<8x32xf32>
    %135 = arith.subf %134, %127 : vector<8x32xf32>
    %136 = arith.mulf %135, %133 : vector<8x32xf32>
    %137 = arith.mulf %127, %71 : vector<8x32xf32>
    %138 = arith.addf %136, %137 : vector<8x32xf32>
    %139 = arith.addi %26, %c1_i32_48 : i32
    %140 = vector.broadcast %139 : i32 to vector<8x1xi32>
    %141 = arith.cmpi slt, %140, %17 : vector<8x1xi32>
    %cst_55 = arith.constant 0.000000e+00 : f32
    %142 = vector.shape_cast %141 : vector<8x1xi1> to vector<8x1xi1>
    %143 = vector.broadcast %142 : vector<8x1xi1> to vector<8x32xi1>
    %144 = vector.broadcast %cst_55 : f32 to vector<8x32xf32>
    %145 = arith.select %143, %138, %144 : vector<8x32xi1>, vector<8x32xf32>
    %146 = arith.index_cast %c1_i32_48 : i32 to index
    %c0_56 = arith.constant 0 : index
    %c0_57 = arith.constant 0 : index
    %147 = vector.load %arg15[%146, %c0_56, %c0_57] : memref<4x8x32xf32, #tpu.memory_space<vmem>>, vector<1x8x32xf32>
    %148 = vector.shape_cast %147 : vector<1x8x32xf32> to vector<8x32xf32>
    %149 = vector.shape_cast %145 : vector<8x32xf32> to vector<1x8x32xf32>
    tpu.vector_store %arg15[%146, %c0_56, %c0_57], %149 {strides = array<i32>} : memref<4x8x32xf32, #tpu.memory_space<vmem>>, vector<1x8x32xf32>,
    %150 = vector.shape_cast %141 : vector<8x1xi1> to vector<8x1xi1>
    %151 = vector.broadcast %150 : vector<8x1xi1> to vector<8x32xi1>
    %152 = arith.select %151, %138, %71 : vector<8x32xi1>, vector<8x32xf32>
    %c8_i32_58 = arith.constant 8 : i32
    %153 = arith.muli %112, %c8_i32_58 : i32
    %154 = tpu.assume_multiple %153, 8 : i32
    %155 = arith.index_cast %154 : i32 to index
    %c0_59 = arith.constant 0 : index
    %156 = vector.load %arg19[%155, %c0_59] : memref<32x96xf32, #tpu.memory_space<vmem>>, vector<8x96xf32>
    %cst_60 = arith.constant dense<0.000000e+00> : vector<8x96xf32>
    %157 = tpu.matmul %111, %19, %cst_60 {dimension_numbers = #tpu.dot_dimension_numbers<[1], [0], [0], [1], [0, 0, 1, 1], [], []>} : vector<8x32xf32>, vector<32x96xf32>, vector<8x96xf32> -> vector<8x96xf32>
    %158 = vector.extract_strided_slice %156 {offsets = [0, 0], sizes = [8, 64], strides = [1, 1]} : vector<8x96xf32> to vector<8x64xf32>
    %159 = vector.extract_strided_slice %157 {offsets = [0, 0], sizes = [8, 64], strides = [1, 1]} : vector<8x96xf32> to vector<8x64xf32>
    %160 = arith.addf %158, %159 : vector<8x64xf32>
    %161 = arith.negf %160 : vector<8x64xf32>
    %162 = math.exp %161 : vector<8x64xf32>
    %cst_61 = arith.constant 1.000000e+00 : f32
    %163 = vector.broadcast %cst_61 : f32 to vector<8x64xf32>
    %164 = arith.addf %163, %162 : vector<8x64xf32>
    %165 = arith.divf %163, %164 : vector<8x64xf32>
    %166 = vector.extract_strided_slice %165 {offsets = [0, 0], sizes = [8, 32], strides = [1, 1]} : vector<8x64xf32> to vector<8x32xf32>
    %167 = vector.extract_strided_slice %165 {offsets = [0, 32], sizes = [8, 32], strides = [1, 1]} : vector<8x64xf32> to vector<8x32xf32>
    %168 = vector.extract_strided_slice %156 {offsets = [0, 64], sizes = [8, 32], strides = [1, 1]} : vector<8x96xf32> to vector<8x32xf32>
    %169 = vector.extract_strided_slice %157 {offsets = [0, 64], sizes = [8, 32], strides = [1, 1]} : vector<8x96xf32> to vector<8x32xf32>
    %170 = arith.addf %169, %25 : vector<8x32xf32>
    %171 = arith.mulf %166, %170 : vector<8x32xf32>
    %172 = arith.addf %168, %171 : vector<8x32xf32>
    %173 = math.tanh %172 : vector<8x32xf32>
    %cst_62 = arith.constant 1.000000e+00 : f32
    %174 = vector.broadcast %cst_62 : f32 to vector<8x32xf32>
    %175 = arith.subf %174, %167 : vector<8x32xf32>
    %176 = arith.mulf %175, %173 : vector<8x32xf32>
    %177 = arith.mulf %167, %111 : vector<8x32xf32>
    %178 = arith.addf %176, %177 : vector<8x32xf32>
    %179 = arith.addi %28, %112 : i32
    %180 = vector.broadcast %179 : i32 to vector<8x1xi32>
    %181 = arith.cmpi slt, %180, %17 : vector<8x1xi32>
    %cst_63 = arith.constant 0.000000e+00 : f32
    %182 = vector.shape_cast %181 : vector<8x1xi1> to vector<8x1xi1>
    %183 = vector.broadcast %182 : vector<8x1xi1> to vector<8x32xi1>
    %184 = vector.broadcast %cst_63 : f32 to vector<8x32xf32>
    %185 = arith.select %183, %178, %184 : vector<8x32xi1>, vector<8x32xf32>
    %186 = arith.index_cast %112 : i32 to index
    %c0_64 = arith.constant 0 : index
    %c0_65 = arith.constant 0 : index
    %187 = vector.load %arg16[%186, %c0_64, %c0_65] : memref<4x8x32xf32, #tpu.memory_space<vmem>>, vector<1x8x32xf32>
    %188 = vector.shape_cast %187 : vector<1x8x32xf32> to vector<8x32xf32>
    %189 = vector.shape_cast %185 : vector<8x32xf32> to vector<1x8x32xf32>
    tpu.vector_store %arg16[%186, %c0_64, %c0_65], %189 {strides = array<i32>} : memref<4x8x32xf32, #tpu.memory_space<vmem>>, vector<1x8x32xf32>,
    %190 = vector.shape_cast %181 : vector<8x1xi1> to vector<8x1xi1>
    %191 = vector.broadcast %190 : vector<8x1xi1> to vector<8x32xi1>
    %192 = arith.select %191, %178, %111 : vector<8x32xi1>, vector<8x32xf32>
    %c2_i32 = arith.constant 2 : i32
    %c3_i32_66 = arith.constant 3 : i32
    %193 = arith.subi %c3_i32_66, %c2_i32 : i32
    %c8_i32_67 = arith.constant 8 : i32
    %194 = arith.muli %c2_i32, %c8_i32_67 : i32
    %195 = tpu.assume_multiple %194, 8 : i32
    %196 = arith.index_cast %195 : i32 to index
    %c0_68 = arith.constant 0 : index
    %197 = vector.load %arg18[%196, %c0_68] : memref<32x96xf32, #tpu.memory_space<vmem>>, vector<8x96xf32>
    %cst_69 = arith.constant dense<0.000000e+00> : vector<8x96xf32>
    %198 = tpu.matmul %152, %18, %cst_69 {dimension_numbers = #tpu.dot_dimension_numbers<[1], [0], [0], [1], [0, 0, 1, 1], [], []>} : vector<8x32xf32>, vector<32x96xf32>, vector<8x96xf32> -> vector<8x96xf32>
    %199 = vector.extract_strided_slice %197 {offsets = [0, 0], sizes = [8, 64], strides = [1, 1]} : vector<8x96xf32> to vector<8x64xf32>
    %200 = vector.extract_strided_slice %198 {offsets = [0, 0], sizes = [8, 64], strides = [1, 1]} : vector<8x96xf32> to vector<8x64xf32>
    %201 = arith.addf %199, %200 : vector<8x64xf32>
    %202 = arith.negf %201 : vector<8x64xf32>
    %203 = math.exp %202 : vector<8x64xf32>
    %cst_70 = arith.constant 1.000000e+00 : f32
    %204 = vector.broadcast %cst_70 : f32 to vector<8x64xf32>
    %205 = arith.addf %204, %203 : vector<8x64xf32>
    %206 = arith.divf %204, %205 : vector<8x64xf32>
    %207 = vector.extract_strided_slice %206 {offsets = [0, 0], sizes = [8, 32], strides = [1, 1]} : vector<8x64xf32> to vector<8x32xf32>
    %208 = vector.extract_strided_slice %206 {offsets = [0, 32], sizes = [8, 32], strides = [1, 1]} : vector<8x64xf32> to vector<8x32xf32>
    %209 = vector.extract_strided_slice %197 {offsets = [0, 64], sizes = [8, 32], strides = [1, 1]} : vector<8x96xf32> to vector<8x32xf32>
    %210 = vector.extract_strided_slice %198 {offsets = [0, 64], sizes = [8, 32], strides = [1, 1]} : vector<8x96xf32> to vector<8x32xf32>
    %211 = arith.addf %210, %22 : vector<8x32xf32>
    %212 = arith.mulf %207, %211 : vector<8x32xf32>
    %213 = arith.addf %209, %212 : vector<8x32xf32>
    %214 = math.tanh %213 : vector<8x32xf32>
    %cst_71 = arith.constant 1.000000e+00 : f32
    %215 = vector.broadcast %cst_71 : f32 to vector<8x32xf32>
    %216 = arith.subf %215, %208 : vector<8x32xf32>
    %217 = arith.mulf %216, %214 : vector<8x32xf32>
    %218 = arith.mulf %208, %152 : vector<8x32xf32>
    %219 = arith.addf %217, %218 : vector<8x32xf32>
    %220 = arith.addi %26, %c2_i32 : i32
    %221 = vector.broadcast %220 : i32 to vector<8x1xi32>
    %222 = arith.cmpi slt, %221, %17 : vector<8x1xi32>
    %cst_72 = arith.constant 0.000000e+00 : f32
    %223 = vector.shape_cast %222 : vector<8x1xi1> to vector<8x1xi1>
    %224 = vector.broadcast %223 : vector<8x1xi1> to vector<8x32xi1>
    %225 = vector.broadcast %cst_72 : f32 to vector<8x32xf32>
    %226 = arith.select %224, %219, %225 : vector<8x32xi1>, vector<8x32xf32>
    %227 = arith.index_cast %c2_i32 : i32 to index
    %c0_73 = arith.constant 0 : index
    %c0_74 = arith.constant 0 : index
    %228 = vector.load %arg15[%227, %c0_73, %c0_74] : memref<4x8x32xf32, #tpu.memory_space<vmem>>, vector<1x8x32xf32>
    %229 = vector.shape_cast %228 : vector<1x8x32xf32> to vector<8x32xf32>
    %230 = vector.shape_cast %226 : vector<8x32xf32> to vector<1x8x32xf32>
    tpu.vector_store %arg15[%227, %c0_73, %c0_74], %230 {strides = array<i32>} : memref<4x8x32xf32, #tpu.memory_space<vmem>>, vector<1x8x32xf32>,
    %231 = vector.shape_cast %222 : vector<8x1xi1> to vector<8x1xi1>
    %232 = vector.broadcast %231 : vector<8x1xi1> to vector<8x32xi1>
    %233 = arith.select %232, %219, %152 : vector<8x32xi1>, vector<8x32xf32>
    %c8_i32_75 = arith.constant 8 : i32
    %234 = arith.muli %193, %c8_i32_75 : i32
    %235 = tpu.assume_multiple %234, 8 : i32
    %236 = arith.index_cast %235 : i32 to index
    %c0_76 = arith.constant 0 : index
    %237 = vector.load %arg19[%236, %c0_76] : memref<32x96xf32, #tpu.memory_space<vmem>>, vector<8x96xf32>
    %cst_77 = arith.constant dense<0.000000e+00> : vector<8x96xf32>
    %238 = tpu.matmul %192, %19, %cst_77 {dimension_numbers = #tpu.dot_dimension_numbers<[1], [0], [0], [1], [0, 0, 1, 1], [], []>} : vector<8x32xf32>, vector<32x96xf32>, vector<8x96xf32> -> vector<8x96xf32>
    %239 = vector.extract_strided_slice %237 {offsets = [0, 0], sizes = [8, 64], strides = [1, 1]} : vector<8x96xf32> to vector<8x64xf32>
    %240 = vector.extract_strided_slice %238 {offsets = [0, 0], sizes = [8, 64], strides = [1, 1]} : vector<8x96xf32> to vector<8x64xf32>
    %241 = arith.addf %239, %240 : vector<8x64xf32>
    %242 = arith.negf %241 : vector<8x64xf32>
    %243 = math.exp %242 : vector<8x64xf32>
    %cst_78 = arith.constant 1.000000e+00 : f32
    %244 = vector.broadcast %cst_78 : f32 to vector<8x64xf32>
    %245 = arith.addf %244, %243 : vector<8x64xf32>
    %246 = arith.divf %244, %245 : vector<8x64xf32>
    %247 = vector.extract_strided_slice %246 {offsets = [0, 0], sizes = [8, 32], strides = [1, 1]} : vector<8x64xf32> to vector<8x32xf32>
    %248 = vector.extract_strided_slice %246 {offsets = [0, 32], sizes = [8, 32], strides = [1, 1]} : vector<8x64xf32> to vector<8x32xf32>
    %249 = vector.extract_strided_slice %237 {offsets = [0, 64], sizes = [8, 32], strides = [1, 1]} : vector<8x96xf32> to vector<8x32xf32>
    %250 = vector.extract_strided_slice %238 {offsets = [0, 64], sizes = [8, 32], strides = [1, 1]} : vector<8x96xf32> to vector<8x32xf32>
    %251 = arith.addf %250, %25 : vector<8x32xf32>
    %252 = arith.mulf %247, %251 : vector<8x32xf32>
    %253 = arith.addf %249, %252 : vector<8x32xf32>
    %254 = math.tanh %253 : vector<8x32xf32>
    %cst_79 = arith.constant 1.000000e+00 : f32
    %255 = vector.broadcast %cst_79 : f32 to vector<8x32xf32>
    %256 = arith.subf %255, %248 : vector<8x32xf32>
    %257 = arith.mulf %256, %254 : vector<8x32xf32>
    %258 = arith.mulf %248, %192 : vector<8x32xf32>
    %259 = arith.addf %257, %258 : vector<8x32xf32>
    %260 = arith.addi %28, %193 : i32
    %261 = vector.broadcast %260 : i32 to vector<8x1xi32>
    %262 = arith.cmpi slt, %261, %17 : vector<8x1xi32>
    %cst_80 = arith.constant 0.000000e+00 : f32
    %263 = vector.shape_cast %262 : vector<8x1xi1> to vector<8x1xi1>
    %264 = vector.broadcast %263 : vector<8x1xi1> to vector<8x32xi1>
    %265 = vector.broadcast %cst_80 : f32 to vector<8x32xf32>
    %266 = arith.select %264, %259, %265 : vector<8x32xi1>, vector<8x32xf32>
    %267 = arith.index_cast %193 : i32 to index
    %c0_81 = arith.constant 0 : index
    %c0_82 = arith.constant 0 : index
    %268 = vector.load %arg16[%267, %c0_81, %c0_82] : memref<4x8x32xf32, #tpu.memory_space<vmem>>, vector<1x8x32xf32>
    %269 = vector.shape_cast %268 : vector<1x8x32xf32> to vector<8x32xf32>
    %270 = vector.shape_cast %266 : vector<8x32xf32> to vector<1x8x32xf32>
    tpu.vector_store %arg16[%267, %c0_81, %c0_82], %270 {strides = array<i32>} : memref<4x8x32xf32, #tpu.memory_space<vmem>>, vector<1x8x32xf32>,
    %271 = vector.shape_cast %262 : vector<8x1xi1> to vector<8x1xi1>
    %272 = vector.broadcast %271 : vector<8x1xi1> to vector<8x32xi1>
    %273 = arith.select %272, %259, %192 : vector<8x32xi1>, vector<8x32xf32>
    %c3_i32_83 = arith.constant 3 : i32
    %c3_i32_84 = arith.constant 3 : i32
    %274 = arith.subi %c3_i32_84, %c3_i32_83 : i32
    %c8_i32_85 = arith.constant 8 : i32
    %275 = arith.muli %c3_i32_83, %c8_i32_85 : i32
    %276 = tpu.assume_multiple %275, 8 : i32
    %277 = arith.index_cast %276 : i32 to index
    %c0_86 = arith.constant 0 : index
    %278 = vector.load %arg18[%277, %c0_86] : memref<32x96xf32, #tpu.memory_space<vmem>>, vector<8x96xf32>
    %cst_87 = arith.constant dense<0.000000e+00> : vector<8x96xf32>
    %279 = tpu.matmul %233, %18, %cst_87 {dimension_numbers = #tpu.dot_dimension_numbers<[1], [0], [0], [1], [0, 0, 1, 1], [], []>} : vector<8x32xf32>, vector<32x96xf32>, vector<8x96xf32> -> vector<8x96xf32>
    %280 = vector.extract_strided_slice %278 {offsets = [0, 0], sizes = [8, 64], strides = [1, 1]} : vector<8x96xf32> to vector<8x64xf32>
    %281 = vector.extract_strided_slice %279 {offsets = [0, 0], sizes = [8, 64], strides = [1, 1]} : vector<8x96xf32> to vector<8x64xf32>
    %282 = arith.addf %280, %281 : vector<8x64xf32>
    %283 = arith.negf %282 : vector<8x64xf32>
    %284 = math.exp %283 : vector<8x64xf32>
    %cst_88 = arith.constant 1.000000e+00 : f32
    %285 = vector.broadcast %cst_88 : f32 to vector<8x64xf32>
    %286 = arith.addf %285, %284 : vector<8x64xf32>
    %287 = arith.divf %285, %286 : vector<8x64xf32>
    %288 = vector.extract_strided_slice %287 {offsets = [0, 0], sizes = [8, 32], strides = [1, 1]} : vector<8x64xf32> to vector<8x32xf32>
    %289 = vector.extract_strided_slice %287 {offsets = [0, 32], sizes = [8, 32], strides = [1, 1]} : vector<8x64xf32> to vector<8x32xf32>
    %290 = vector.extract_strided_slice %278 {offsets = [0, 64], sizes = [8, 32], strides = [1, 1]} : vector<8x96xf32> to vector<8x32xf32>
    %291 = vector.extract_strided_slice %279 {offsets = [0, 64], sizes = [8, 32], strides = [1, 1]} : vector<8x96xf32> to vector<8x32xf32>
    %292 = arith.addf %291, %22 : vector<8x32xf32>
    %293 = arith.mulf %288, %292 : vector<8x32xf32>
    %294 = arith.addf %290, %293 : vector<8x32xf32>
    %295 = math.tanh %294 : vector<8x32xf32>
    %cst_89 = arith.constant 1.000000e+00 : f32
    %296 = vector.broadcast %cst_89 : f32 to vector<8x32xf32>
    %297 = arith.subf %296, %289 : vector<8x32xf32>
    %298 = arith.mulf %297, %295 : vector<8x32xf32>
    %299 = arith.mulf %289, %233 : vector<8x32xf32>
    %300 = arith.addf %298, %299 : vector<8x32xf32>
    %301 = arith.addi %26, %c3_i32_83 : i32
    %302 = vector.broadcast %301 : i32 to vector<8x1xi32>
    %303 = arith.cmpi slt, %302, %17 : vector<8x1xi32>
    %cst_90 = arith.constant 0.000000e+00 : f32
    %304 = vector.shape_cast %303 : vector<8x1xi1> to vector<8x1xi1>
    %305 = vector.broadcast %304 : vector<8x1xi1> to vector<8x32xi1>
    %306 = vector.broadcast %cst_90 : f32 to vector<8x32xf32>
    %307 = arith.select %305, %300, %306 : vector<8x32xi1>, vector<8x32xf32>
    %308 = arith.index_cast %c3_i32_83 : i32 to index
    %c0_91 = arith.constant 0 : index
    %c0_92 = arith.constant 0 : index
    %309 = vector.load %arg15[%308, %c0_91, %c0_92] : memref<4x8x32xf32, #tpu.memory_space<vmem>>, vector<1x8x32xf32>
    %310 = vector.shape_cast %309 : vector<1x8x32xf32> to vector<8x32xf32>
    %311 = vector.shape_cast %307 : vector<8x32xf32> to vector<1x8x32xf32>
    tpu.vector_store %arg15[%308, %c0_91, %c0_92], %311 {strides = array<i32>} : memref<4x8x32xf32, #tpu.memory_space<vmem>>, vector<1x8x32xf32>,
    %312 = vector.shape_cast %303 : vector<8x1xi1> to vector<8x1xi1>
    %313 = vector.broadcast %312 : vector<8x1xi1> to vector<8x32xi1>
    %314 = arith.select %313, %300, %233 : vector<8x32xi1>, vector<8x32xf32>
    %c8_i32_93 = arith.constant 8 : i32
    %315 = arith.muli %274, %c8_i32_93 : i32
    %316 = tpu.assume_multiple %315, 8 : i32
    %317 = arith.index_cast %316 : i32 to index
    %c0_94 = arith.constant 0 : index
    %318 = vector.load %arg19[%317, %c0_94] : memref<32x96xf32, #tpu.memory_space<vmem>>, vector<8x96xf32>
    %cst_95 = arith.constant dense<0.000000e+00> : vector<8x96xf32>
    %319 = tpu.matmul %273, %19, %cst_95 {dimension_numbers = #tpu.dot_dimension_numbers<[1], [0], [0], [1], [0, 0, 1, 1], [], []>} : vector<8x32xf32>, vector<32x96xf32>, vector<8x96xf32> -> vector<8x96xf32>
    %320 = vector.extract_strided_slice %318 {offsets = [0, 0], sizes = [8, 64], strides = [1, 1]} : vector<8x96xf32> to vector<8x64xf32>
    %321 = vector.extract_strided_slice %319 {offsets = [0, 0], sizes = [8, 64], strides = [1, 1]} : vector<8x96xf32> to vector<8x64xf32>
    %322 = arith.addf %320, %321 : vector<8x64xf32>
    %323 = arith.negf %322 : vector<8x64xf32>
    %324 = math.exp %323 : vector<8x64xf32>
    %cst_96 = arith.constant 1.000000e+00 : f32
    %325 = vector.broadcast %cst_96 : f32 to vector<8x64xf32>
    %326 = arith.addf %325, %324 : vector<8x64xf32>
    %327 = arith.divf %325, %326 : vector<8x64xf32>
    %328 = vector.extract_strided_slice %327 {offsets = [0, 0], sizes = [8, 32], strides = [1, 1]} : vector<8x64xf32> to vector<8x32xf32>
    %329 = vector.extract_strided_slice %327 {offsets = [0, 32], sizes = [8, 32], strides = [1, 1]} : vector<8x64xf32> to vector<8x32xf32>
    %330 = vector.extract_strided_slice %318 {offsets = [0, 64], sizes = [8, 32], strides = [1, 1]} : vector<8x96xf32> to vector<8x32xf32>
    %331 = vector.extract_strided_slice %319 {offsets = [0, 64], sizes = [8, 32], strides = [1, 1]} : vector<8x96xf32> to vector<8x32xf32>
    %332 = arith.addf %331, %25 : vector<8x32xf32>
    %333 = arith.mulf %328, %332 : vector<8x32xf32>
    %334 = arith.addf %330, %333 : vector<8x32xf32>
    %335 = math.tanh %334 : vector<8x32xf32>
    %cst_97 = arith.constant 1.000000e+00 : f32
    %336 = vector.broadcast %cst_97 : f32 to vector<8x32xf32>
    %337 = arith.subf %336, %329 : vector<8x32xf32>
    %338 = arith.mulf %337, %335 : vector<8x32xf32>
    %339 = arith.mulf %329, %273 : vector<8x32xf32>
    %340 = arith.addf %338, %339 : vector<8x32xf32>
    %341 = arith.addi %28, %274 : i32
    %342 = vector.broadcast %341 : i32 to vector<8x1xi32>
    %343 = arith.cmpi slt, %342, %17 : vector<8x1xi32>
    %cst_98 = arith.constant 0.000000e+00 : f32
    %344 = vector.shape_cast %343 : vector<8x1xi1> to vector<8x1xi1>
    %345 = vector.broadcast %344 : vector<8x1xi1> to vector<8x32xi1>
    %346 = vector.broadcast %cst_98 : f32 to vector<8x32xf32>
    %347 = arith.select %345, %340, %346 : vector<8x32xi1>, vector<8x32xf32>
    %348 = arith.index_cast %274 : i32 to index
    %c0_99 = arith.constant 0 : index
    %c0_100 = arith.constant 0 : index
    %349 = vector.load %arg16[%348, %c0_99, %c0_100] : memref<4x8x32xf32, #tpu.memory_space<vmem>>, vector<1x8x32xf32>
    %350 = vector.shape_cast %349 : vector<1x8x32xf32> to vector<8x32xf32>
    %351 = vector.shape_cast %347 : vector<8x32xf32> to vector<1x8x32xf32>
    tpu.vector_store %arg16[%348, %c0_99, %c0_100], %351 {strides = array<i32>} : memref<4x8x32xf32, #tpu.memory_space<vmem>>, vector<1x8x32xf32>,
    %352 = vector.shape_cast %343 : vector<8x1xi1> to vector<8x1xi1>
    %353 = vector.broadcast %352 : vector<8x1xi1> to vector<8x32xi1>
    %354 = arith.select %353, %340, %273 : vector<8x32xi1>, vector<8x32xf32>
    %c4_i32_101 = arith.constant 4 : i32
    %c0_102 = arith.constant 0 : index
    %c0_103 = arith.constant 0 : index
    %355 = vector.load %arg20[%c0_102, %c0_103] : memref<8x32xf32, #tpu.memory_space<vmem>>, vector<8x32xf32>
    tpu.vector_store %arg20[%c0_102, %c0_103], %314 {strides = array<i32>} : memref<8x32xf32, #tpu.memory_space<vmem>>, vector<8x32xf32>,
    %c0_104 = arith.constant 0 : index
    %c0_105 = arith.constant 0 : index
    %356 = vector.load %arg21[%c0_104, %c0_105] : memref<8x32xf32, #tpu.memory_space<vmem>>, vector<8x32xf32>
    tpu.vector_store %arg21[%c0_104, %c0_105], %354 {strides = array<i32>} : memref<8x32xf32, #tpu.memory_space<vmem>>, vector<8x32xf32>,
    %c1_i32_106 = arith.constant 1 : i32
    %357 = arith.cmpi eq, %arg0, %c1_i32_106 : i32
    %358 = arith.extui %357 : i1 to i32
    %c0_i32_107 = arith.constant 0 : i32
    %359 = arith.cmpi ne, %358, %c0_i32_107 : i32
    scf.if %359 {
      %360 = arith.truncf %314 : vector<8x32xf32> to vector<8x32xbf16>
      %c0_108 = arith.constant 0 : index
      %c0_109 = arith.constant 0 : index
      %361 = vector.load %arg12[%c0_108, %c0_109] : memref<32x32xbf16, #tpu.memory_space<vmem>>, vector<32x32xbf16>
      %cst_110 = arith.constant dense<0.000000e+00> : vector<8x32xf32>
      %362 = tpu.matmul %360, %361, %cst_110 {dimension_numbers = #tpu.dot_dimension_numbers<[1], [0], [0], [1], [0, 0, 1, 1], [], []>} : vector<8x32xbf16>, vector<32x32xbf16>, vector<8x32xf32> -> vector<8x32xf32>
      %363 = arith.truncf %354 : vector<8x32xf32> to vector<8x32xbf16>
      %c0_111 = arith.constant 0 : index
      %c0_112 = arith.constant 0 : index
      %364 = vector.load %arg13[%c0_111, %c0_112] : memref<32x32xbf16, #tpu.memory_space<vmem>>, vector<32x32xbf16>
      %cst_113 = arith.constant dense<0.000000e+00> : vector<8x32xf32>
      %365 = tpu.matmul %363, %364, %cst_113 {dimension_numbers = #tpu.dot_dimension_numbers<[1], [0], [0], [1], [0, 0, 1, 1], [], []>} : vector<8x32xbf16>, vector<32x32xbf16>, vector<8x32xf32> -> vector<8x32xf32>
      %366 = arith.addf %362, %365 : vector<8x32xf32>
      %c0_114 = arith.constant 0 : index
      %c0_115 = arith.constant 0 : index
      %367 = vector.load %arg14[%c0_114, %c0_115] : memref<1x32xf32, #tpu.memory_space<vmem>>, vector<1x32xf32>
      %368 = vector.broadcast %367 : vector<1x32xf32> to vector<8x32xf32>
      %369 = arith.addf %366, %368 : vector<8x32xf32>
      %370 = math.tanh %369 : vector<8x32xf32>
      %c0_116 = arith.constant 0 : index
      %c0_117 = arith.constant 0 : index
      %371 = vector.load %arg17[%c0_116, %c0_117] : memref<8x32xf32, #tpu.memory_space<vmem>>, vector<8x32xf32>
      tpu.vector_store %arg17[%c0_116, %c0_117], %370 {strides = array<i32>} : memref<8x32xf32, #tpu.memory_space<vmem>>, vector<8x32xf32>,
    } else {
    }
    return
  }
  func.func @transform_0(%arg0: i32) -> (i32, i32) {
    %c0_i32 = arith.constant 0 : i32
    %c0_i32_0 = arith.constant 0 : i32
    %c0_i32_1 = arith.constant 0 : i32
    return %c0_i32, %c0_i32_0 : i32, i32
  }
  func.func @transform_1(%arg0: i32) -> (i32, i32) {
    %c0_i32 = arith.constant 0 : i32
    %c0_i32_0 = arith.constant 0 : i32
    return %arg0, %c0_i32 : i32, i32
  }
  func.func @transform_2(%arg0: i32) -> (i32, i32) {
    %c1_i32 = arith.constant 1 : i32
    %0 = arith.subi %c1_i32, %arg0 : i32
    %c0_i32 = arith.constant 0 : i32
    %c0_i32_0 = arith.constant 0 : i32
    return %0, %c0_i32 : i32, i32
  }
  func.func @transform_3(%arg0: i32) -> (i32, i32) {
    %c0_i32 = arith.constant 0 : i32
    %c0_i32_0 = arith.constant 0 : i32
    %c0_i32_1 = arith.constant 0 : i32
    return %c0_i32, %c0_i32_0 : i32, i32
  }
  func.func @transform_4(%arg0: i32) -> (i32, i32) {
    %c0_i32 = arith.constant 0 : i32
    %c0_i32_0 = arith.constant 0 : i32
    %c0_i32_1 = arith.constant 0 : i32
    return %c0_i32, %c0_i32_0 : i32, i32
  }
  func.func @transform_5(%arg0: i32) -> (i32, i32) {
    %c0_i32 = arith.constant 0 : i32
    %c0_i32_0 = arith.constant 0 : i32
    %c0_i32_1 = arith.constant 0 : i32
    return %c0_i32, %c0_i32_0 : i32, i32
  }
  func.func @transform_6(%arg0: i32) -> (i32, i32) {
    %c0_i32 = arith.constant 0 : i32
    %c0_i32_0 = arith.constant 0 : i32
    %c0_i32_1 = arith.constant 0 : i32
    return %c0_i32, %c0_i32_0 : i32, i32
  }
  func.func @transform_7(%arg0: i32) -> (i32, i32) {
    %c0_i32 = arith.constant 0 : i32
    %c0_i32_0 = arith.constant 0 : i32
    %c0_i32_1 = arith.constant 0 : i32
    return %c0_i32, %c0_i32_0 : i32, i32
  }
  func.func @transform_8(%arg0: i32) -> (i32, i32) {
    %c0_i32 = arith.constant 0 : i32
    %c0_i32_0 = arith.constant 0 : i32
    %c0_i32_1 = arith.constant 0 : i32
    return %c0_i32, %c0_i32_0 : i32, i32
  }
  func.func @transform_9(%arg0: i32) -> (i32, i32) {
    %c0_i32 = arith.constant 0 : i32
    %c0_i32_0 = arith.constant 0 : i32
    %c0_i32_1 = arith.constant 0 : i32
    return %c0_i32, %c0_i32_0 : i32, i32
  }
  func.func @transform_10(%arg0: i32) -> (i32, i32) {
    %c0_i32 = arith.constant 0 : i32
    %c0_i32_0 = arith.constant 0 : i32
    %c0_i32_1 = arith.constant 0 : i32
    return %c0_i32, %c0_i32_0 : i32, i32
  }
  func.func @transform_11(%arg0: i32) -> (i32, i32) {
    %c0_i32 = arith.constant 0 : i32
    %c0_i32_0 = arith.constant 0 : i32
    %c0_i32_1 = arith.constant 0 : i32
    return %c0_i32, %c0_i32_0 : i32, i32
  }
  func.func @transform_12(%arg0: i32) -> (i32, i32) {
    %c0_i32 = arith.constant 0 : i32
    %c0_i32_0 = arith.constant 0 : i32
    %c0_i32_1 = arith.constant 0 : i32
    return %c0_i32, %c0_i32_0 : i32, i32
  }
  func.func @transform_13(%arg0: i32) -> (i32, i32) {
    %c0_i32 = arith.constant 0 : i32
    %c0_i32_0 = arith.constant 0 : i32
    %c0_i32_1 = arith.constant 0 : i32
    return %c0_i32, %c0_i32_0 : i32, i32
  }
  func.func @transform_14(%arg0: i32) -> (i32, i32, i32) {
    %c0_i32 = arith.constant 0 : i32
    %c0_i32_0 = arith.constant 0 : i32
    %c0_i32_1 = arith.constant 0 : i32
    return %arg0, %c0_i32, %c0_i32_0 : i32, i32, i32
  }
  func.func @transform_15(%arg0: i32) -> (i32, i32, i32) {
    %c1_i32 = arith.constant 1 : i32
    %0 = arith.subi %c1_i32, %arg0 : i32
    %c0_i32 = arith.constant 0 : i32
    %c0_i32_0 = arith.constant 0 : i32
    %c0_i32_1 = arith.constant 0 : i32
    return %0, %c0_i32, %c0_i32_0 : i32, i32, i32
  }
  func.func @transform_16(%arg0: i32) -> (i32, i32) {
    %c0_i32 = arith.constant 0 : i32
    %c0_i32_0 = arith.constant 0 : i32
    %c0_i32_1 = arith.constant 0 : i32
    return %c0_i32, %c0_i32_0 : i32, i32
  }
}

</mosaic_0001>

<llo_original>
// kernel: tpu_custom_call.1
$region0: #{tpu_custom_call.1}
  #allocation0 [shape = 'u32[]', space=smem, size = 0x4, offset = 0x4, fixed_abs, tag = 'smem constant byte address 0x4 - core index']
  #allocation1 [shape = 'u32[144,128]{1,0:T(1,128)}', space=vmem, size = 0x12000, scoped, tag = 'internal scratch']
  #allocation2 [shape = 'f32[32,96]{1,0:T(8,128)}', space=vmem, size = 0x4000, scoped, tag = 'scratch operand']
  #allocation3 [shape = 'f32[32,96]{1,0:T(8,128)}', space=vmem, size = 0x4000, scoped, tag = 'scratch operand']
  #allocation4 [shape = 'f32[8,32]{1,0:T(8,128)}', space=vmem, size = 0x1000, scoped, tag = 'scratch operand']
  #allocation5 [shape = 'f32[8,32]{1,0:T(8,128)}', space=vmem, size = 0x1000, scoped, tag = 'scratch operand']
  %s0 = inlined_call_operand.vmem [shape: s32[8,1], index: 0, kind: input, shape index: {}]
  %s1 = inlined_call_operand.vmem [shape: bf16[64,32], index: 1, kind: input, shape index: {}]
  %s2 = inlined_call_operand.vmem [shape: bf16[64,32], index: 2, kind: input, shape index: {}]
  %s3 = inlined_call_operand.vmem [shape: bf16[32,96], index: 3, kind: input, shape index: {}]
  %s4 = inlined_call_operand.vmem [shape: bf16[32,96], index: 4, kind: input, shape index: {}]
  %s5 = inlined_call_operand.vmem [shape: f32[1,96], index: 5, kind: input, shape index: {}]
  %s6 = inlined_call_operand.vmem [shape: f32[1,96], index: 6, kind: input, shape index: {}]
  %s7 = inlined_call_operand.vmem [shape: f32[32,96], index: 7, kind: input, shape index: {}]
  %s8 = inlined_call_operand.vmem [shape: f32[32,96], index: 8, kind: input, shape index: {}]
  %s9 = inlined_call_operand.hbm [shape: f32[1,32], index: 9, kind: input, shape index: {}]
  %s10 = inlined_call_operand.hbm [shape: f32[1,32], index: 10, kind: input, shape index: {}]
  %s11 = inlined_call_operand.vmem [shape: bf16[32,32], index: 11, kind: input, shape index: {}]
  %s12 = inlined_call_operand.vmem [shape: bf16[32,32], index: 12, kind: input, shape index: {}]
  %s13 = inlined_call_operand.vmem [shape: f32[1,32], index: 13, kind: input, shape index: {}]
  %s14 = inlined_call_operand.hbm [shape: f32[8,8,32], index: 14, kind: output, shape index: {0}]
  %s15 = inlined_call_operand.hbm [shape: f32[8,8,32], index: 15, kind: output, shape index: {1}]
  %s16 = inlined_call_operand.hbm [shape: f32[8,32], index: 16, kind: output, shape index: {2}]
  %17 = xla_tuple %s14, %s15, %s16
  %s18 = sld [smem:[#allocation0]]
  $region121: #{tpu_custom_call.1} parent=0
    _
  %s20 = ssub.s32 1, %s18
  %s21 = scalar_select 0, %s20, %s18
  $region1: #{tpu_custom_call.1} parent=0
    #allocation6 [shape = 'u8[512]{0}', space=vmem, size = 0x400, scoped, tag = 'input window, operand 9, single buffered']
    #allocation7 [shape = 's32[2]{0}', space=sflag, size = 0x8, scoped, tag = 'scoped memory for tpu_custom_call.1']
    #allocation8 [shape = 's32[2]{0}', space=sflag, size = 0x8, scoped, tag = 'scoped memory for tpu_custom_call.1']
    #allocation9 [shape = 'u8[512]{0}', space=vmem, size = 0x400, scoped, tag = 'input window, operand 10, single buffered']
    #allocation10 [shape = 's32[1]{0}', space=sflag, size = 0x4, scoped, tag = 'scoped memory for tpu_custom_call.1']
    #allocation11 [shape = 'u8[32768]{0}', space=vmem, size = 0x8000, scoped, tag = 'output window, operand 0']
    #allocation12 [shape = 'u8[32768]{0}', space=vmem, size = 0x8000, scoped, tag = 'output window, operand 1']
    #allocation13 [shape = 's32[2]{0}', space=sflag, size = 0x8, scoped, tag = 'scoped memory for tpu_custom_call.1']
    #allocation14 [shape = 'u8[4096]{0}', space=vmem, size = 0x1000, scoped, tag = 'output window, operand 2, single buffered']
    %22 = vsyncpa [#allocation7], 0
    %23 = vsyncpa [#allocation10], 0
    %24 = vsyncpa [#allocation8], 0
    %s25 = scalar_lea.sflag [#allocation8], 1
    %26 = vsyncpa %s25, 0
    %27 = vsyncpa [#allocation13], 0
    %s28 = scalar_lea.sflag [#allocation13], 1
    %29 = vsyncpa %s28, 0
    loop: start=0, step=1, limit=4
    $region2: #{tpu_custom_call.1} parent=1 // loop_pre_header
      _
    $region3: #{tpu_custom_call.1} parent=1 // loop_header
      %s31 = sphi 0, %s35
      %p32 = scmp.ge.s32.totalorder %s31, 4
      %s39 = sphi 0, %s39
      %s41 = sphi 0, %s39
      %s42 = sphi 0, %s41
      %s56 = sphi 0, %s42
      %s62 = sphi 0, %s64
      %s65 = sphi 0, %s62
      %s66 = sphi 0, %s65
      %s82 = sphi 0, %s66
      %s90 = sphi 0, %s92
      %s93 = sphi 0, %s90
      %s94 = sphi 0, %s93
      %s110 = sphi 0, %s94
      %s114 = sphi 0, %s114
      %s116 = sphi 0, %s114
      %s117 = sphi 0, %s116
      %s131 = sphi 0, %s117
      %s135 = sphi 0, %s135
      %s137 = sphi 0, %s135
      %s138 = sphi 0, %s137
      %s152 = sphi 0, %s138
      %s156 = sphi 0, %s156
      %s158 = sphi 0, %s156
      %s159 = sphi 0, %s158
      %s173 = sphi 0, %s159
      %s177 = sphi 0, %s177
      %s179 = sphi 0, %s177
      %s180 = sphi 0, %s179
      %s194 = sphi 0, %s180
      %s198 = sphi 0, %s198
      %s200 = sphi 0, %s198
      %s201 = sphi 0, %s200
      %s215 = sphi 0, %s201
      %s219 = sphi 0, %s219
      %s221 = sphi 0, %s219
      %s222 = sphi 0, %s221
      %s236 = sphi 0, %s222
      %s240 = sphi 0, %s240
      %s242 = sphi 0, %s240
      %s243 = sphi 0, %s242
      %s257 = sphi 0, %s243
      %s261 = sphi 0, %s261
      %s263 = sphi 0, %s261
      %s264 = sphi 0, %s263
      %s278 = sphi 0, %s264
      %s282 = sphi 0, %s282
      %s284 = sphi 0, %s282
      %s285 = sphi 0, %s284
      %s299 = sphi 0, %s285
      %s303 = sphi 0, %s303
      %s305 = sphi 0, %s303
      %s306 = sphi 0, %s305
      %s320 = sphi 0, %s306
      %s324 = sphi 0, %s324
      %s326 = sphi 0, %s324
      %s327 = sphi 0, %s326
      %s341 = sphi 0, %s327
      %s347 = sphi 0, %s349
      %s350 = sphi 0, %s347
      %s351 = sphi 0, %s350
      %s367 = sphi 0, %s351
      %s375 = sphi 0, %s377
      %s378 = sphi 0, %s375
      %s379 = sphi 0, %s378
      %s395 = sphi 0, %s379
      %s399 = sphi 0, %s399
      %s401 = sphi 0, %s399
      %s402 = sphi 0, %s401
      %s416 = sphi 0, %s402
    $region4: #{tpu_custom_call.1} parent=1 // loop_header_branch
      %34 = sbr.rel (%p32) target = $region8
    $region5: #{tpu_custom_call.1} parent=1 // loop_body
      %s36 = ssub.s32 %s31, 1
      %s37 = ssub.s32 %s31, 2
      %s38 = sadd.s32 %s31, 1
      %s40 = sadd.s32 %s39, 1
      %p43 = scmp.eq.s32.totalorder %s31, 1
      %p44 = scmp.ne.s32.totalorder %s39, %s41
      %p45 = scmp.eq.s32.totalorder %s31, 0
      %p46 = por %p44, %p45
      %p47 = scmp.ne.s32.totalorder %s39, %s41
      %p48 = scmp.eq.s32.totalorder %s36, 1
      %p49 = por %p47, %p48
      %p50 = scmp.ne.s32.totalorder %s41, %s42
      %p51 = scmp.eq.s32.totalorder %s36, 0
      %p52 = por %p50, %p51
      %p53 = scmp.ne.s32.totalorder %s41, %s42
      %p54 = scmp.eq.s32.totalorder %s37, 1
      %p55 = por %p53, %p54
      %p57 = scmp.ne.s32.totalorder %s42, %s56
      %p58 = scmp.eq.s32.totalorder %s37, 0
      %p59 = por %p57, %p58
      %s60 = ssub.s32 %s31, %s38
      %p61 = scmp.eq.s32.totalorder %s60, 0
      %s63 = sadd.s32 %s62, 1
      %s64 = scalar_select %p61, %s62, %s63
      %p67 = pneg %p61
      %p68 = scmp.eq.s32.totalorder %s31, 1
      %p69 = por %p67, %p68
      %p70 = scmp.ne.s32.totalorder %s62, %s65
      %p71 = scmp.eq.s32.totalorder %s31, 0
      %p72 = por %p70, %p71
      %p73 = scmp.ne.s32.totalorder %s62, %s65
      %p74 = scmp.eq.s32.totalorder %s36, 1
      %p75 = por %p73, %p74
      %p76 = scmp.ne.s32.totalorder %s65, %s66
      %p77 = scmp.eq.s32.totalorder %s36, 0
      %p78 = por %p76, %p77
      %p79 = scmp.ne.s32.totalorder %s65, %s66
      %p80 = scmp.eq.s32.totalorder %s37, 1
      %p81 = por %p79, %p80
      %p83 = scmp.ne.s32.totalorder %s66, %s82
      %p84 = scmp.eq.s32.totalorder %s37, 0
      %p85 = por %p83, %p84
      %s86 = ssub.s32 1, %s31
      %s87 = ssub.s32 1, %s38
      %s88 = ssub.s32 %s86, %s87
      %p89 = scmp.eq.s32.totalorder %s88, 0
      %s91 = sadd.s32 %s90, 1
      %s92 = scalar_select %p89, %s90, %s91
      %p95 = pneg %p89
      %p96 = scmp.eq.s32.totalorder %s31, 1
      %p97 = por %p95, %p96
      %p98 = scmp.ne.s32.totalorder %s90, %s93
      %p99 = scmp.eq.s32.totalorder %s31, 0
      %p100 = por %p98, %p99
      %p101 = scmp.ne.s32.totalorder %s90, %s93
      %p102 = scmp.eq.s32.totalorder %s36, 1
      %p103 = por %p101, %p102
      %p104 = scmp.ne.s32.totalorder %s93, %s94
      %p105 = scmp.eq.s32.totalorder %s36, 0
      %p106 = por %p104, %p105
      %p107 = scmp.ne.s32.totalorder %s93, %s94
      %p108 = scmp.eq.s32.totalorder %s37, 1
      %p109 = por %p107, %p108
      %p111 = scmp.ne.s32.totalorder %s94, %s110
      %p112 = scmp.eq.s32.totalorder %s37, 0
      %p113 = por %p111, %p112
      %s115 = sadd.s32 %s114, 1
      %p118 = scmp.eq.s32.totalorder %s31, 1
      %p119 = scmp.ne.s32.totalorder %s114, %s116
      %p120 = scmp.eq.s32.totalorder %s31, 0
      %p121 = por %p119, %p120
      %p122 = scmp.ne.s32.totalorder %s114, %s116
      %p123 = scmp.eq.s32.totalorder %s36, 1
      %p124 = por %p122, %p123
      %p125 = scmp.ne.s32.totalorder %s116, %s117
      %p126 = scmp.eq.s32.totalorder %s36, 0
      %p127 = por %p125, %p126
      %p128 = scmp.ne.s32.totalorder %s116, %s117
      %p129 = scmp.eq.s32.totalorder %s37, 1
      %p130 = por %p128, %p129
      %p132 = scmp.ne.s32.totalorder %s117, %s131
      %p133 = scmp.eq.s32.totalorder %s37, 0
      %p134 = por %p132, %p133
      %s136 = sadd.s32 %s135, 1
      %p139 = scmp.eq.s32.totalorder %s31, 1
      %p140 = scmp.ne.s32.totalorder %s135, %s137
      %p141 = scmp.eq.s32.totalorder %s31, 0
      %p142 = por %p140, %p141
      %p143 = scmp.ne.s32.totalorder %s135, %s137
      %p144 = scmp.eq.s32.totalorder %s36, 1
      %p145 = por %p143, %p144
      %p146 = scmp.ne.s32.totalorder %s137, %s138
      %p147 = scmp.eq.s32.totalorder %s36, 0
      %p148 = por %p146, %p147
      %p149 = scmp.ne.s32.totalorder %s137, %s138
      %p150 = scmp.eq.s32.totalorder %s37, 1
      %p151 = por %p149, %p150
      %p153 = scmp.ne.s32.totalorder %s138, %s152
      %p154 = scmp.eq.s32.totalorder %s37, 0
      %p155 = por %p153, %p154
      %s157 = sadd.s32 %s156, 1
      %p160 = scmp.eq.s32.totalorder %s31, 1
      %p161 = scmp.ne.s32.totalorder %s156, %s158
      %p162 = scmp.eq.s32.totalorder %s31, 0
      %p163 = por %p161, %p162
      %p164 = scmp.ne.s32.totalorder %s156, %s158
      %p165 = scmp.eq.s32.totalorder %s36, 1
      %p166 = por %p164, %p165
      %p167 = scmp.ne.s32.totalorder %s158, %s159
      %p168 = scmp.eq.s32.totalorder %s36, 0
      %p169 = por %p167, %p168
      %p170 = scmp.ne.s32.totalorder %s158, %s159
      %p171 = scmp.eq.s32.totalorder %s37, 1
      %p172 = por %p170, %p171
      %p174 = scmp.ne.s32.totalorder %s159, %s173
      %p175 = scmp.eq.s32.totalorder %s37, 0
      %p176 = por %p174, %p175
      %s178 = sadd.s32 %s177, 1
      %p181 = scmp.eq.s32.totalorder %s31, 1
      %p182 = scmp.ne.s32.totalorder %s177, %s179
      %p183 = scmp.eq.s32.totalorder %s31, 0
      %p184 = por %p182, %p183
      %p185 = scmp.ne.s32.totalorder %s177, %s179
      %p186 = scmp.eq.s32.totalorder %s36, 1
      %p187 = por %p185, %p186
      %p188 = scmp.ne.s32.totalorder %s179, %s180
      %p189 = scmp.eq.s32.totalorder %s36, 0
      %p190 = por %p188, %p189
      %p191 = scmp.ne.s32.totalorder %s179, %s180
      %p192 = scmp.eq.s32.totalorder %s37, 1
      %p193 = por %p191, %p192
      %p195 = scmp.ne.s32.totalorder %s180, %s194
      %p196 = scmp.eq.s32.totalorder %s37, 0
      %p197 = por %p195, %p196
      %s199 = sadd.s32 %s198, 1
      %p202 = scmp.eq.s32.totalorder %s31, 1
      %p203 = scmp.ne.s32.totalorder %s198, %s200
      %p204 = scmp.eq.s32.totalorder %s31, 0
      %p205 = por %p203, %p204
      %p206 = scmp.ne.s32.totalorder %s198, %s200
      %p207 = scmp.eq.s32.totalorder %s36, 1
      %p208 = por %p206, %p207
      %p209 = scmp.ne.s32.totalorder %s200, %s201
      %p210 = scmp.eq.s32.totalorder %s36, 0
      %p211 = por %p209, %p210
      %p212 = scmp.ne.s32.totalorder %s200, %s201
      %p213 = scmp.eq.s32.totalorder %s37, 1
      %p214 = por %p212, %p213
      %p216 = scmp.ne.s32.totalorder %s201, %s215
      %p217 = scmp.eq.s32.totalorder %s37, 0
      %p218 = por %p216, %p217
      %s220 = sadd.s32 %s219, 1
      %p223 = scmp.eq.s32.totalorder %s31, 1
      %p224 = scmp.ne.s32.totalorder %s219, %s221
      %p225 = scmp.eq.s32.totalorder %s31, 0
      %p226 = por %p224, %p225
      %p227 = scmp.ne.s32.totalorder %s219, %s221
      %p228 = scmp.eq.s32.totalorder %s36, 1
      %p229 = por %p227, %p228
      %p230 = scmp.ne.s32.totalorder %s221, %s222
      %p231 = scmp.eq.s32.totalorder %s36, 0
      %p232 = por %p230, %p231
      %p233 = scmp.ne.s32.totalorder %s221, %s222
      %p234 = scmp.eq.s32.totalorder %s37, 1
      %p235 = por %p233, %p234
      %p237 = scmp.ne.s32.totalorder %s222, %s236
      %p238 = scmp.eq.s32.totalorder %s37, 0
      %p239 = por %p237, %p238
      %s241 = sadd.s32 %s240, 1
      %p244 = scmp.eq.s32.totalorder %s31, 1
      %p245 = scmp.ne.s32.totalorder %s240, %s242
      %p246 = scmp.eq.s32.totalorder %s31, 0
      %p247 = por %p245, %p246
      %p248 = scmp.ne.s32.totalorder %s240, %s242
      %p249 = scmp.eq.s32.totalorder %s36, 1
      %p250 = por %p248, %p249
      %p251 = scmp.ne.s32.totalorder %s242, %s243
      %p252 = scmp.eq.s32.totalorder %s36, 0
      %p253 = por %p251, %p252
      %p254 = scmp.ne.s32.totalorder %s242, %s243
      %p255 = scmp.eq.s32.totalorder %s37, 1
      %p256 = por %p254, %p255
      %p258 = scmp.ne.s32.totalorder %s243, %s257
      %p259 = scmp.eq.s32.totalorder %s37, 0
      %p260 = por %p258, %p259
      %s262 = sadd.s32 %s261, 1
      %p265 = scmp.eq.s32.totalorder %s31, 1
      %p266 = scmp.ne.s32.totalorder %s261, %s263
      %p267 = scmp.eq.s32.totalorder %s31, 0
      %p268 = por %p266, %p267
      %p269 = scmp.ne.s32.totalorder %s261, %s263
      %p270 = scmp.eq.s32.totalorder %s36, 1
      %p271 = por %p269, %p270
      %p272 = scmp.ne.s32.totalorder %s263, %s264
      %p273 = scmp.eq.s32.totalorder %s36, 0
      %p274 = por %p272, %p273
      %p275 = scmp.ne.s32.totalorder %s263, %s264
      %p276 = scmp.eq.s32.totalorder %s37, 1
      %p277 = por %p275, %p276
      %p279 = scmp.ne.s32.totalorder %s264, %s278
      %p280 = scmp.eq.s32.totalorder %s37, 0
      %p281 = por %p279, %p280
      %s283 = sadd.s32 %s282, 1
      %p286 = scmp.eq.s32.totalorder %s31, 1
      %p287 = scmp.ne.s32.totalorder %s282, %s284
      %p288 = scmp.eq.s32.totalorder %s31, 0
      %p289 = por %p287, %p288
      %p290 = scmp.ne.s32.totalorder %s282, %s284
      %p291 = scmp.eq.s32.totalorder %s36, 1
      %p292 = por %p290, %p291
      %p293 = scmp.ne.s32.totalorder %s284, %s285
      %p294 = scmp.eq.s32.totalorder %s36, 0
      %p295 = por %p293, %p294
      %p296 = scmp.ne.s32.totalorder %s284, %s285
      %p297 = scmp.eq.s32.totalorder %s37, 1
      %p298 = por %p296, %p297
      %p300 = scmp.ne.s32.totalorder %s285, %s299
      %p301 = scmp.eq.s32.totalorder %s37, 0
      %p302 = por %p300, %p301
      %s304 = sadd.s32 %s303, 1
      %p307 = scmp.eq.s32.totalorder %s31, 1
      %p308 = scmp.ne.s32.totalorder %s303, %s305
      %p309 = scmp.eq.s32.totalorder %s31, 0
      %p310 = por %p308, %p309
      %p311 = scmp.ne.s32.totalorder %s303, %s305
      %p312 = scmp.eq.s32.totalorder %s36, 1
      %p313 = por %p311, %p312
      %p314 = scmp.ne.s32.totalorder %s305, %s306
      %p315 = scmp.eq.s32.totalorder %s36, 0
      %p316 = por %p314, %p315
      %p317 = scmp.ne.s32.totalorder %s305, %s306
      %p318 = scmp.eq.s32.totalorder %s37, 1
      %p319 = por %p317, %p318
      %p321 = scmp.ne.s32.totalorder %s306, %s320
      %p322 = scmp.eq.s32.totalorder %s37, 0
      %p323 = por %p321, %p322
      %s325 = sadd.s32 %s324, 1
      %p328 = scmp.eq.s32.totalorder %s31, 1
      %p329 = scmp.ne.s32.totalorder %s324, %s326
      %p330 = scmp.eq.s32.totalorder %s31, 0
      %p331 = por %p329, %p330
      %p332 = scmp.ne.s32.totalorder %s324, %s326
      %p333 = scmp.eq.s32.totalorder %s36, 1
      %p334 = por %p332, %p333
      %p335 = scmp.ne.s32.totalorder %s326, %s327
      %p336 = scmp.eq.s32.totalorder %s36, 0
      %p337 = por %p335, %p336
      %p338 = scmp.ne.s32.totalorder %s326, %s327
      %p339 = scmp.eq.s32.totalorder %s37, 1
      %p340 = por %p338, %p339
      %p342 = scmp.ne.s32.totalorder %s327, %s341
      %p343 = scmp.eq.s32.totalorder %s37, 0
      %p344 = por %p342, %p343
      %s345 = ssub.s32 %s31, %s38
      %p346 = scmp.eq.s32.totalorder %s345, 0
      %s348 = sadd.s32 %s347, 1
      %s349 = scalar_select %p346, %s347, %s348
      %p352 = pneg %p346
      %p353 = scmp.eq.s32.totalorder %s31, 1
      %p354 = por %p352, %p353
      %p355 = scmp.ne.s32.totalorder %s347, %s350
      %p356 = scmp.eq.s32.totalorder %s31, 0
      %p357 = por %p355, %p356
      %p358 = scmp.ne.s32.totalorder %s347, %s350
      %p359 = scmp.eq.s32.totalorder %s36, 1
      %p360 = por %p358, %p359
      %p361 = scmp.ne.s32.totalorder %s350, %s351
      %p362 = scmp.eq.s32.totalorder %s36, 0
      %p363 = por %p361, %p362
      %p364 = scmp.ne.s32.totalorder %s350, %s351
      %p365 = scmp.eq.s32.totalorder %s37, 1
      %p366 = por %p364, %p365
      %p368 = scmp.ne.s32.totalorder %s351, %s367
      %p369 = scmp.eq.s32.totalorder %s37, 0
      %p370 = por %p368, %p369
      %s371 = ssub.s32 1, %s31
      %s372 = ssub.s32 1, %s38
      %s373 = ssub.s32 %s371, %s372
      %p374 = scmp.eq.s32.totalorder %s373, 0
      %s376 = sadd.s32 %s375, 1
      %s377 = scalar_select %p374, %s375, %s376
      %p380 = pneg %p374
      %p381 = scmp.eq.s32.totalorder %s31, 1
      %p382 = por %p380, %p381
      %p383 = scmp.ne.s32.totalorder %s375, %s378
      %p384 = scmp.eq.s32.totalorder %s31, 0
      %p385 = por %p383, %p384
      %p386 = scmp.ne.s32.totalorder %s375, %s378
      %p387 = scmp.eq.s32.totalorder %s36, 1
      %p388 = por %p386, %p387
      %p389 = scmp.ne.s32.totalorder %s378, %s379
      %p390 = scmp.eq.s32.totalorder %s36, 0
      %p391 = por %p389, %p390
      %p392 = scmp.ne.s32.totalorder %s378, %s379
      %p393 = scmp.eq.s32.totalorder %s37, 1
      %p394 = por %p392, %p393
      %p396 = scmp.ne.s32.totalorder %s379, %s395
      %p397 = scmp.eq.s32.totalorder %s37, 0
      %p398 = por %p396, %p397
      %s400 = sadd.s32 %s399, 1
      %p403 = scmp.eq.s32.totalorder %s31, 1
      %p404 = scmp.ne.s32.totalorder %s399, %s401
      %p405 = scmp.eq.s32.totalorder %s31, 0
      %p406 = por %p404, %p405
      %p407 = scmp.ne.s32.totalorder %s399, %s401
      %p408 = scmp.eq.s32.totalorder %s36, 1
      %p409 = por %p407, %p408
      %p410 = scmp.ne.s32.totalorder %s401, %s402
      %p411 = scmp.eq.s32.totalorder %s36, 0
      %p412 = por %p410, %p411
      %p413 = scmp.ne.s32.totalorder %s401, %s402
      %p414 = scmp.eq.s32.totalorder %s37, 1
      %p415 = por %p413, %p414
      %p417 = scmp.ne.s32.totalorder %s402, %s416
      %p418 = scmp.eq.s32.totalorder %s37, 0
      %p419 = por %p417, %p418
      %p420 = scmp.le.s32.totalorder 1, %s31
      %p421 = scmp.lt.s32.totalorder %s31, 3
      %p422 = pnand %p420, %p421
      %p423 = pneg %p422
      // Predicated region
      $region9: #{tpu_custom_call.1} parent=5 // pred_check
        _
      $region10: #{tpu_custom_call.1} parent=5 // pred_check_branch
        %425 = sbr.rel (%p422) target = $region12
      $region11: #{tpu_custom_call.1} parent=5 // pred_region
        %s426 = ssub.s32 %s31, 1
        // Predicated region
        $region13: #{tpu_custom_call.1} parent=11 // pred_check
          %p427 = pneg %p52
        $region14: #{tpu_custom_call.1} parent=11 // pred_check_branch
          %429 = sbr.rel (%p427) target = $region16
        $region15: #{tpu_custom_call.1} parent=11 // pred_region
          _
        $region16: #{tpu_custom_call.1} parent=11 // pred_fallthru
          _
        // Predicated region
        $region17: #{tpu_custom_call.1} parent=11 // pred_check
          %p430 = pneg %p127
        $region18: #{tpu_custom_call.1} parent=11 // pred_check_branch
          %432 = sbr.rel (%p430) target = $region20
        $region19: #{tpu_custom_call.1} parent=11 // pred_region
          _
        $region20: #{tpu_custom_call.1} parent=11 // pred_fallthru
          _
        // Predicated region
        $region21: #{tpu_custom_call.1} parent=11 // pred_check
          %p433 = pneg %p148
        $region22: #{tpu_custom_call.1} parent=11 // pred_check_branch
          %435 = sbr.rel (%p433) target = $region24
        $region23: #{tpu_custom_call.1} parent=11 // pred_region
          _
        $region24: #{tpu_custom_call.1} parent=11 // pred_fallthru
          _
        // Predicated region
        $region25: #{tpu_custom_call.1} parent=11 // pred_check
          %p436 = pneg %p169
        $region26: #{tpu_custom_call.1} parent=11 // pred_check_branch
          %438 = sbr.rel (%p436) target = $region28
        $region27: #{tpu_custom_call.1} parent=11 // pred_region
          _
        $region28: #{tpu_custom_call.1} parent=11 // pred_fallthru
          _
        // Predicated region
        $region29: #{tpu_custom_call.1} parent=11 // pred_check
          %p439 = pneg %p190
        $region30: #{tpu_custom_call.1} parent=11 // pred_check_branch
          %441 = sbr.rel (%p439) target = $region32
        $region31: #{tpu_custom_call.1} parent=11 // pred_region
          _
        $region32: #{tpu_custom_call.1} parent=11 // pred_fallthru
          _
        // Predicated region
        $region33: #{tpu_custom_call.1} parent=11 // pred_check
          %p442 = pneg %p211
        $region34: #{tpu_custom_call.1} parent=11 // pred_check_branch
          %444 = sbr.rel (%p442) target = $region36
        $region35: #{tpu_custom_call.1} parent=11 // pred_region
          _
        $region36: #{tpu_custom_call.1} parent=11 // pred_fallthru
          _
        // Predicated region
        $region37: #{tpu_custom_call.1} parent=11 // pred_check
          %p445 = pneg %p232
        $region38: #{tpu_custom_call.1} parent=11 // pred_check_branch
          %447 = sbr.rel (%p445) target = $region40
        $region39: #{tpu_custom_call.1} parent=11 // pred_region
          _
        $region40: #{tpu_custom_call.1} parent=11 // pred_fallthru
          _
        // Predicated region
        $region41: #{tpu_custom_call.1} parent=11 // pred_check
          %p448 = pneg %p253
        $region42: #{tpu_custom_call.1} parent=11 // pred_check_branch
          %450 = sbr.rel (%p448) target = $region44
        $region43: #{tpu_custom_call.1} parent=11 // pred_region
          %s452 = ssub.s32 16, 16
          %453 = vsyncadd [#allocation7], %s452
          %s455 = sshll.u32 [#allocation6], 4
          %s456 = int_to_ptr.vmem [resolvable:$true] %s455
          %458 = dma.hbm_to_vmem [thread:$0]  %s9, 16, %s456, [#allocation7]
        $region44: #{tpu_custom_call.1} parent=11 // pred_fallthru
          _
        // Predicated region
        $region45: #{tpu_custom_call.1} parent=11 // pred_check
          %p459 = pneg %p274
        $region46: #{tpu_custom_call.1} parent=11 // pred_check_branch
          %461 = sbr.rel (%p459) target = $region48
        $region47: #{tpu_custom_call.1} parent=11 // pred_region
          %s463 = ssub.s32 16, 16
          %464 = vsyncadd [#allocation10], %s463
          %s466 = sshll.u32 [#allocation9], 4
          %s467 = int_to_ptr.vmem [resolvable:$true] %s466
          %469 = dma.hbm_to_vmem [thread:$0]  %s10, 16, %s467, [#allocation10]
        $region48: #{tpu_custom_call.1} parent=11 // pred_fallthru
          _
        // Predicated region
        $region49: #{tpu_custom_call.1} parent=11 // pred_check
          %p470 = pneg %p295
        $region50: #{tpu_custom_call.1} parent=11 // pred_check_branch
          %472 = sbr.rel (%p470) target = $region52
        $region51: #{tpu_custom_call.1} parent=11 // pred_region
          _
        $region52: #{tpu_custom_call.1} parent=11 // pred_fallthru
          _
        // Predicated region
        $region53: #{tpu_custom_call.1} parent=11 // pred_check
          %p473 = pneg %p316
        $region54: #{tpu_custom_call.1} parent=11 // pred_check_branch
          %475 = sbr.rel (%p473) target = $region56
        $region55: #{tpu_custom_call.1} parent=11 // pred_region
          _
        $region56: #{tpu_custom_call.1} parent=11 // pred_fallthru
          _
        // Predicated region
        $region57: #{tpu_custom_call.1} parent=11 // pred_check
          %p476 = pneg %p337
        $region58: #{tpu_custom_call.1} parent=11 // pred_check_branch
          %478 = sbr.rel (%p476) target = $region60
        $region59: #{tpu_custom_call.1} parent=11 // pred_region
          _
        $region60: #{tpu_custom_call.1} parent=11 // pred_fallthru
          _
      $region12: #{tpu_custom_call.1} parent=5 // pred_fallthru
        _
      %p479 = scmp.lt.s32.totalorder %s31, 2
      // Predicated region
      $region61: #{tpu_custom_call.1} parent=5 // pred_check
        %p480 = pneg %p479
      $region62: #{tpu_custom_call.1} parent=5 // pred_check_branch
        %482 = sbr.rel (%p480) target = $region64
      $region63: #{tpu_custom_call.1} parent=5 // pred_region
        // Predicated region
        $region65: #{tpu_custom_call.1} parent=63 // pred_check
          %p483 = pneg %p72
        $region66: #{tpu_custom_call.1} parent=63 // pred_check_branch
          %485 = sbr.rel (%p483) target = $region68
        $region67: #{tpu_custom_call.1} parent=63 // pred_region
          %s486 = smul.u32 4, %s31
          %p487 = scmp.lt.s32.totalorder %s486, 7
          %s488 = scalar_select %p487, %s486, 7
          %s489 = smul.addr %s488, 4
          %s490 = scalar_lea.vmem %s1, %s489
          %s491 = smul.u32 4, %s31
        $region68: #{tpu_custom_call.1} parent=63 // pred_fallthru
          _
        // Predicated region
        $region69: #{tpu_custom_call.1} parent=63 // pred_check
          %p492 = pneg %p100
        $region70: #{tpu_custom_call.1} parent=63 // pred_check_branch
          %494 = sbr.rel (%p492) target = $region72
        $region71: #{tpu_custom_call.1} parent=63 // pred_region
          %s495 = ssub.s32 1, %s31
          %s496 = smul.u32 4, %s495
          %p497 = scmp.lt.s32.totalorder %s496, 7
          %s498 = scalar_select %p497, %s496, 7
          %s499 = smul.addr %s498, 4
          %s500 = scalar_lea.vmem %s2, %s499
          %s501 = ssub.s32 1, %s31
          %s502 = smul.u32 4, %s501
        $region72: #{tpu_custom_call.1} parent=63 // pred_fallthru
          _
      $region64: #{tpu_custom_call.1} parent=5 // pred_fallthru
        _
      %p503 = scmp.le.s32.totalorder 1, %s31
      %p504 = scmp.lt.s32.totalorder %s31, 3
      %p505 = pnand %p503, %p504
      %p506 = pneg %p505
      // Predicated region
      $region73: #{tpu_custom_call.1} parent=5 // pred_check
        _
      $region74: #{tpu_custom_call.1} parent=5 // pred_check_branch
        %508 = sbr.rel (%p505) target = $region76
      $region75: #{tpu_custom_call.1} parent=5 // pred_region
        %s509 = ssub.s32 %s31, 1
        // Predicated region
        $region77: #{tpu_custom_call.1} parent=75 // pred_check
          %p510 = pneg %p253
        $region78: #{tpu_custom_call.1} parent=75 // pred_check_branch
          %512 = sbr.rel (%p510) target = $region80
        $region79: #{tpu_custom_call.1} parent=75 // pred_region
          %513 = dma.done [#allocation7], 16
        $region80: #{tpu_custom_call.1} parent=75 // pred_fallthru
          _
        // Predicated region
        $region81: #{tpu_custom_call.1} parent=75 // pred_check
          %p514 = pneg %p274
        $region82: #{tpu_custom_call.1} parent=75 // pred_check_branch
          %516 = sbr.rel (%p514) target = $region84
        $region83: #{tpu_custom_call.1} parent=75 // pred_region
          %517 = dma.done [#allocation10], 16
        $region84: #{tpu_custom_call.1} parent=75 // pred_fallthru
          _
        %p518 = pneg %p52
        %p519 = pneg %p49
        %s520 = smul.u32 4, %s36
        %p521 = scmp.lt.s32.totalorder %s520, 7
        %s522 = scalar_select %p521, %s520, 7
        %s523 = smul.addr %s522, 4
        %s524 = scalar_lea.vmem %s1, %s523
        %p525 = pneg %p78
        %p526 = pneg %p75
        %s527 = ssub.s32 1, %s36
        %s528 = smul.u32 4, %s527
        %p529 = scmp.lt.s32.totalorder %s528, 7
        %s530 = scalar_select %p529, %s528, 7
        %s531 = smul.addr %s530, 4
        %s532 = scalar_lea.vmem %s2, %s531
        %p533 = pneg %p106
        %p534 = pneg %p103
        %p535 = pneg %p127
        %p536 = pneg %p124
        %p537 = pneg %p148
        %p538 = pneg %p145
        %p539 = pneg %p169
        %p540 = pneg %p166
        %p541 = pneg %p190
        %p542 = pneg %p187
        %p543 = pneg %p211
        %p544 = pneg %p208
        %p545 = pneg %p232
        %p546 = pneg %p229
        %p547 = pneg %p253
        %p548 = pneg %p250
        %p549 = pneg %p274
        %p550 = pneg %p271
        %p551 = pneg %p295
        %p552 = pneg %p292
        %p553 = pneg %p316
        %p554 = pneg %p313
        %p555 = pneg %p337
        %p556 = pneg %p334
        %p557 = pneg %p363
        %p558 = pneg %p360
        %s559 = sand.u32 %s350, 1
        %s560 = scalar_lea.sflag [#allocation8], %s559
        %s561 = sand.u32 %s350, 1
        %s562 = smul.addr %s561, 32
        %s563 = scalar_lea.vmem [#allocation11], %s562
        %p564 = pneg %p391
        %p565 = pneg %p388
        %s566 = sand.u32 %s36, 1
        %s567 = scalar_lea.sflag [#allocation13], %s566
        %s568 = sand.u32 %s378, 1
        %s569 = smul.addr %s568, 32
        %s570 = scalar_lea.vmem [#allocation12], %s569
        %p571 = pneg %p412
        %p572 = pneg %p409
        %s573 = smul.u32 4, %s36
        %p574 = scmp.lt.s32.totalorder %s573, 7
        %s575 = scalar_select %p574, %s573, 7
        %s576 = smul.addr %s575, 4
        %s577 = scalar_lea.vmem %s1, %s576
        %s578 = smul.u32 4, %s36
        %s579 = ssub.s32 1, %s36
        %s580 = smul.u32 4, %s579
        %p581 = scmp.lt.s32.totalorder %s580, 7
        %s582 = scalar_select %p581, %s580, 7
        %s583 = smul.addr %s582, 4
        %s584 = scalar_lea.vmem %s2, %s583
        %s585 = ssub.s32 1, %s36
        %s586 = smul.u32 4, %s585
        %s587 = smul.u32 4, %s36
        %s588 = ssub.s32 1, %s36
        %s589 = smul.u32 4, %s588
        %p591 = scmp.eq.s32.totalorder %s36, 0
        // Predicated region
        $region85: #{tpu_custom_call.1} parent=75 // pred_check
          %p592 = pneg %p591
        $region86: #{tpu_custom_call.1} parent=75 // pred_check_branch
          %594 = sbr.rel (%p592) target = $region88
        $region87: #{tpu_custom_call.1} parent=75 // pred_region
          %vm595 = vcmask 261120
          %596 = vst.msk [vmem:[#allocation4] sm:$0xff] %vm595, 0.0
          %597 = vst.msk [vmem:[#allocation5] sm:$0xff] %vm595, 0.0
        $region88: #{tpu_custom_call.1} parent=75 // pred_fallthru
          _
        %v598 = vld [vmem:[%s577] sm:$0xf]
        %v599 = vld [vmem:[%s577 + $0x4] sm:$0xf]
        %v600 = vld [vmem:[%s577 + $0x8] sm:$0xf]
        %v601 = vld [vmem:[%s577 + $0xc] sm:$0xf]
        %v602 = vld [vmem:[%s3] sm:$0xf]
        %v603 = vld [vmem:[%s3 + $0x4] sm:$0xf]
        %v604 = vld [vmem:[%s3 + $0x8] sm:$0xf]
        %v605 = vld [vmem:[%s3 + $0xc] sm:$0xf]
        %v606 = vld [vmem:[%s5] sm:$0x1]
        %v608 = vlaneseq
        %v609 = vshrl.u32 %v608, 7
        %v610 = vsub.s32 0, %v609
        %v611 = vrot.slane %v606, %v610
        %v617 = vunpack.c.l.b16 %v598
        %v618 = vunpack.c.l.b16 %v599
        %v619 = vunpack.c.l.b16 %v600
        %v620 = vunpack.c.l.b16 %v601
        %v621 = vpack.c.b16 %v618, %v617
        %v622 = vpack.c.b16 %v620, %v619
        %v627 = vunpack.c.l.b16 %v602
        %v628 = vunpack.c.l.b16 %v603
        %v629 = vunpack.c.l.b16 %v604
        %v630 = vunpack.c.l.b16 %v605
        %v631 = vpack.c.b16 %v628, %v627
        %v632 = vpack.c.b16 %v630, %v629
        %vm635 = vcmask 261120
        %v637 = vsel %vm635, %v621, 0
        %v640 = vsel %vm635, %v622, 0
        %642 = vmatprep.subr.bf16.mxu0 0
        %643 = vmatpush1.bf16.msra.mxu0 %v631
        %644 = vmatprep.subr.bf16.mxu0 0
        %645 = vmatpush1.bf16.msra.mxu0 %v632
        %646 = vmatprep.subr.bf16.mxu0 0
        %647 = vmatpush1.bf16.msra.mxu0 0
        %648 = vmatprep.subr.bf16.mxu0 0
        %649 = vmatpush1.bf16.msra.mxu0 0
        %650 = vmatprep.subr.bf16.mxu0 0
        %651 = vmatpush1.bf16.msra.mxu0 0
        %652 = vmatprep.subr.bf16.mxu0 0
        %653 = vmatpush1.bf16.msra.mxu0 0
        %654 = vmatprep.subr.bf16.mxu0 0
        %655 = vmatpush1.bf16.msra.mxu0 0
        %656 = vmatprep.subr.bf16.mxu0 0
        %657 = vmatpush1.bf16.msra.mxu0 0
        %658 = vmatprep.subr.bf16.mxu0 0
        %659 = vmatpush1.bf16.msra.mxu0 0
        %660 = vmatprep.subr.bf16.mxu0 0
        %661 = vmatpush1.bf16.msra.mxu0 0
        %662 = vmatprep.subr.bf16.mxu0 0
        %663 = vmatpush1.bf16.msra.mxu0 0
        %664 = vmatprep.subr.bf16.mxu0 0
        %665 = vmatpush1.bf16.msra.mxu0 0
        %666 = vmatprep.subr.bf16.mxu0 0
        %667 = vmatpush1.bf16.msra.mxu0 0
        %668 = vmatprep.subr.bf16.mxu0 0
        %669 = vmatpush1.bf16.msra.mxu0 0
        %670 = vmatprep.subr.bf16.mxu0 0
        %671 = vmatpush1.bf16.msra.mxu0 0
        %672 = vmatprep.subr.bf16.mxu0 0
        %673 = vmatpush1.bf16.msra.mxu0 0
        %674 = vmatprep.mubr.bf16.mxu0 0
        %675 = vmatmul.mubr.bf16.gmra.mrb[0].mxu0 %v637
        %v676 = vpop.f32.mrb[0].mxu0
        %v677 = vadd.f32 %v611, %v676
        %v678 = vpop.f32.mrb[0].mxu0
        %v679 = vpop.f32.mrb[0].mxu0
        %v680 = vadd.f32 %v611, %v679
        %v681 = vpop.f32.mrb[0].mxu0
        %682 = vmatprep.mubr.bf16.mxu0 0
        %683 = vmatmul.mubr.bf16.gmra.mrb[0].mxu0 %v640
        %v684 = vpop.f32.mrb[0].mxu0
        %v685 = vadd.f32 %v611, %v684
        %v686 = vpop.f32.mrb[0].mxu0
        %v687 = vpop.f32.mrb[0].mxu0
        %v688 = vadd.f32 %v611, %v687
        %v689 = vpop.f32.mrb[0].mxu0
        %690 = vdwg.mxu0
        %vm691 = vcmask 785408
        %692 = vst.msk [vmem:[#allocation2] sm:$0xff] %vm691, %v677
        %693 = vst.msk [vmem:[#allocation2 + $0x8] sm:$0xff] %vm691, %v680
        %694 = vst.msk [vmem:[#allocation2 + $0x10] sm:$0xff] %vm691, %v685
        %695 = vst.msk [vmem:[#allocation2 + $0x18] sm:$0xff] %vm691, %v688
        %v696 = vld [vmem:[%s584] sm:$0xf]
        %v697 = vld [vmem:[%s584 + $0x4] sm:$0xf]
        %v698 = vld [vmem:[%s584 + $0x8] sm:$0xf]
        %v699 = vld [vmem:[%s584 + $0xc] sm:$0xf]
        %v700 = vld [vmem:[%s4] sm:$0xf]
        %v701 = vld [vmem:[%s4 + $0x4] sm:$0xf]
        %v702 = vld [vmem:[%s4 + $0x8] sm:$0xf]
        %v703 = vld [vmem:[%s4 + $0xc] sm:$0xf]
        %v704 = vld [vmem:[%s6] sm:$0x1]
        %v706 = vlaneseq
        %v707 = vshrl.u32 %v706, 7
        %v708 = vsub.s32 0, %v707
        %v709 = vrot.slane %v704, %v708
        %v715 = vunpack.c.l.b16 %v696
        %v716 = vunpack.c.l.b16 %v697
        %v717 = vunpack.c.l.b16 %v698
        %v718 = vunpack.c.l.b16 %v699
        %v719 = vpack.c.b16 %v716, %v715
        %v720 = vpack.c.b16 %v718, %v717
        %v725 = vunpack.c.l.b16 %v700
        %v726 = vunpack.c.l.b16 %v701
        %v727 = vunpack.c.l.b16 %v702
        %v728 = vunpack.c.l.b16 %v703
        %v729 = vpack.c.b16 %v726, %v725
        %v730 = vpack.c.b16 %v728, %v727
        %v734 = vsel %vm635, %v719, 0
        %v737 = vsel %vm635, %v720, 0
        %739 = vmatprep.subr.bf16.mxu0 0
        %740 = vmatpush1.bf16.msra.mxu0 %v729
        %741 = vmatprep.subr.bf16.mxu0 0
        %742 = vmatpush1.bf16.msra.mxu0 %v730
        %743 = vmatprep.subr.bf16.mxu0 0
        %744 = vmatpush1.bf16.msra.mxu0 0
        %745 = vmatprep.subr.bf16.mxu0 0
        %746 = vmatpush1.bf16.msra.mxu0 0
        %747 = vmatprep.subr.bf16.mxu0 0
        %748 = vmatpush1.bf16.msra.mxu0 0
        %749 = vmatprep.subr.bf16.mxu0 0
        %750 = vmatpush1.bf16.msra.mxu0 0
        %751 = vmatprep.subr.bf16.mxu0 0
        %752 = vmatpush1.bf16.msra.mxu0 0
        %753 = vmatprep.subr.bf16.mxu0 0
        %754 = vmatpush1.bf16.msra.mxu0 0
        %755 = vmatprep.subr.bf16.mxu0 0
        %756 = vmatpush1.bf16.msra.mxu0 0
        %757 = vmatprep.subr.bf16.mxu0 0
        %758 = vmatpush1.bf16.msra.mxu0 0
        %759 = vmatprep.subr.bf16.mxu0 0
        %760 = vmatpush1.bf16.msra.mxu0 0
        %761 = vmatprep.subr.bf16.mxu0 0
        %762 = vmatpush1.bf16.msra.mxu0 0
        %763 = vmatprep.subr.bf16.mxu0 0
        %764 = vmatpush1.bf16.msra.mxu0 0
        %765 = vmatprep.subr.bf16.mxu0 0
        %766 = vmatpush1.bf16.msra.mxu0 0
        %767 = vmatprep.subr.bf16.mxu0 0
        %768 = vmatpush1.bf16.msra.mxu0 0
        %769 = vmatprep.subr.bf16.mxu0 0
        %770 = vmatpush1.bf16.msra.mxu0 0
        %771 = vmatprep.mubr.bf16.mxu0 0
        %772 = vmatmul.mubr.bf16.gmra.mrb[0].mxu0 %v734
        %v773 = vpop.f32.mrb[0].mxu0
        %v774 = vadd.f32 %v709, %v773
        %v775 = vpop.f32.mrb[0].mxu0
        %v776 = vpop.f32.mrb[0].mxu0
        %v777 = vadd.f32 %v709, %v776
        %v778 = vpop.f32.mrb[0].mxu0
        %779 = vmatprep.mubr.bf16.mxu0 0
        %780 = vmatmul.mubr.bf16.gmra.mrb[0].mxu0 %v737
        %v781 = vpop.f32.mrb[0].mxu0
        %v782 = vadd.f32 %v709, %v781
        %v783 = vpop.f32.mrb[0].mxu0
        %v784 = vpop.f32.mrb[0].mxu0
        %v785 = vadd.f32 %v709, %v784
        %v786 = vpop.f32.mrb[0].mxu0
        %787 = vdwg.mxu0
        %788 = vst.msk [vmem:[#allocation3] sm:$0xff] %vm691, %v774
        %789 = vst.msk [vmem:[#allocation3 + $0x8] sm:$0xff] %vm691, %v777
        %790 = vst.msk [vmem:[#allocation3 + $0x10] sm:$0xff] %vm691, %v782
        %791 = vst.msk [vmem:[#allocation3 + $0x18] sm:$0xff] %vm691, %v785
        %v792 = vld [vmem:[%s0] sm:$0xff]
        %v793 = vld [vmem:[%s7] sm:$0xff]
        %v794 = vld [vmem:[%s7 + $0x8] sm:$0xff]
        %v795 = vld [vmem:[%s7 + $0x10] sm:$0xff]
        %v796 = vld [vmem:[%s7 + $0x18] sm:$0xff]
        %v797 = vld [vmem:[%s8] sm:$0xff]
        %v798 = vld [vmem:[%s8 + $0x8] sm:$0xff]
        %v799 = vld [vmem:[%s8 + $0x10] sm:$0xff]
        %v800 = vld [vmem:[%s8 + $0x18] sm:$0xff]
        %v801 = vld [vmem:[#allocation6] sm:$0x1]
        %v803 = vlaneseq
        %v804 = vshrl.u32 %v803, 7
        %v805 = vsub.s32 0, %v804
        %v806 = vrot.slane %v801, %v805
        %v807 = vld [vmem:[#allocation9] sm:$0x1]
        %v809 = vlaneseq
        %v810 = vshrl.u32 %v809, 7
        %v811 = vsub.s32 0, %v810
        %v812 = vrot.slane %v807, %v811
        %s813 = smul.u32 %s36, 4
        %s814 = ssub.s32 1, %s36
        %s815 = smul.u32 %s814, 4
        %v816 = vld [vmem:[#allocation4] sm:$0xff]
        %v817 = vld [vmem:[#allocation5] sm:$0xff]
        %v818 = vld [vmem:[#allocation2] sm:$0xff]
        %v820 = vsel %vm635, %v816, 0
        %822 = vmatprep.subr.mxu0 0.0
        %823 = vmatpush1.msra.mxu0 %v793
        %824 = vmatprep.subr.mxu0 0.0
        %825 = vmatpush1.msra.mxu0 %v794
        %826 = vmatprep.subr.mxu0 0.0
        %827 = vmatpush1.msra.mxu0 %v795
        %828 = vmatprep.subr.mxu0 0.0
        %829 = vmatpush1.msra.mxu0 %v796
        %830 = vmatprep.subr.mxu0 0.0
        %831 = vmatpush1.msra.mxu0 0.0
        %832 = vmatprep.subr.mxu0 0.0
        %833 = vmatpush1.msra.mxu0 0.0
        %834 = vmatprep.subr.mxu0 0.0
        %835 = vmatpush1.msra.mxu0 0.0
        %836 = vmatprep.subr.mxu0 0.0
        %837 = vmatpush1.msra.mxu0 0.0
        %838 = vmatprep.subr.mxu0 0.0
        %839 = vmatpush1.msra.mxu0 0.0
        %840 = vmatprep.subr.mxu0 0.0
        %841 = vmatpush1.msra.mxu0 0.0
        %842 = vmatprep.subr.mxu0 0.0
        %843 = vmatpush1.msra.mxu0 0.0
        %844 = vmatprep.subr.mxu0 0.0
        %845 = vmatpush1.msra.mxu0 0.0
        %846 = vmatprep.subr.mxu0 0.0
        %847 = vmatpush1.msra.mxu0 0.0
        %848 = vmatprep.subr.mxu0 0.0
        %849 = vmatpush1.msra.mxu0 0.0
        %850 = vmatprep.subr.mxu0 0.0
        %851 = vmatpush1.msra.mxu0 0.0
        %852 = vmatprep.subr.mxu0 0.0
        %853 = vmatpush1.msra.mxu0 0.0
        %854 = vmatprep.subr.mxu0 0.0
        %855 = vmatpush1.msra.mxu0 0.0
        %856 = vmatprep.subr.mxu0 0.0
        %857 = vmatpush1.msra.mxu0 0.0
        %858 = vmatprep.subr.mxu0 0.0
        %859 = vmatpush1.msra.mxu0 0.0
        %860 = vmatprep.subr.mxu0 0.0
        %861 = vmatpush1.msra.mxu0 0.0
        %862 = vmatprep.subr.mxu0 0.0
        %863 = vmatpush1.msra.mxu0 0.0
        %864 = vmatprep.subr.mxu0 0.0
        %865 = vmatpush1.msra.mxu0 0.0
        %866 = vmatprep.subr.mxu0 0.0
        %867 = vmatpush1.msra.mxu0 0.0
        %868 = vmatprep.subr.mxu0 0.0
        %869 = vmatpush1.msra.mxu0 0.0
        %870 = vmatprep.subr.mxu0 0.0
        %871 = vmatpush1.msra.mxu0 0.0
        %872 = vmatprep.subr.mxu0 0.0
        %873 = vmatpush1.msra.mxu0 0.0
        %874 = vmatprep.subr.mxu0 0.0
        %875 = vmatpush1.msra.mxu0 0.0
        %876 = vmatprep.subr.mxu0 0.0
        %877 = vmatpush1.msra.mxu0 0.0
        %878 = vmatprep.subr.mxu0 0.0
        %879 = vmatpush1.msra.mxu0 0.0
        %880 = vmatprep.subr.mxu0 0.0
        %881 = vmatpush1.msra.mxu0 0.0
        %882 = vmatprep.subr.mxu0 0.0
        %883 = vmatpush1.msra.mxu0 0.0
        %884 = vmatprep.subr.mxu0 0.0
        %885 = vmatpush1.msra.mxu0 0.0
        %886 = vmatprep.mubr.f32.mxu0 0.0
        %887 = vmatmul.mubr.f32.gmra.mrb[0].mxu0 %v820
        %v888 = vpop.f32.mrb[0].mxu0
        %v889 = vadd.f32 0.0, %v888
        %v890 = vpop.f32.mrb[0].mxu0
        %891 = vdwg.mxu0
        %v892 = vadd.f32 %v818, %v889
        %v893 = vxor.u32 %v892, 2147483648
        %v894 = vmul.f32 %v893, 1.442695
        %v895 = vpow.pop %v894
        %v896 = vadd.f32 %v895, 1.0
        %v897 = vrcp.pop %v896
        %v898 = vmul.f32 1.0, %v897
        %899 = vrot.lane.b32.xlu0 %v806, 64
        %v900 = vpop.permute.xlu0 %899
        %v902 = vadd.f32 %v889, %v900
        %904 = vrot.lane.b32.xlu0 %v902, 64
        %v905 = vpop.permute.xlu0 %904
        %v907 = vmul.f32 %v898, %v905
        %909 = vrot.lane.b32.xlu0 %v907, 64
        %v910 = vpop.permute.xlu0 %909
        %v912 = vadd.f32 %v818, %v910
        %v913 = vtanh.pop %v912
        %v914 = vsub.f32 1.0, %v898
        %916 = vrot.lane.b32.xlu0 %v913, 96
        %v917 = vpop.permute.xlu0 %916
        %v919 = vmul.f32 %v914, %v917
        %920 = vrot.lane.b32.xlu0 %v816, 32
        %v921 = vpop.permute.xlu0 %920
        %v923 = vmul.f32 %v898, %v921
        %v924 = vadd.f32 %v919, %v923
        %v925 = vstv %s813
        %vm926 = vcmp.lt.s32.totalorder %v925, %v792
        %v927 = vsel %vm926, 1, 0
        %928 = vset.pattern.permute.xlu0 0
        %929 = vperm.xlu0 %928, %v927
        %v930 = vpop.permute.xlu0 %929
        %vm931 = vcmp.eq.s32.totalorder %v930, 1
        %v932 = vsel %vm931, %v924, 0.0
        %934 = vrot.lane.b32.xlu0 %v932, 96
        %v935 = vpop.permute.xlu0 %934
        %937 = vst.msk [vmem:[%s563] sm:$0xff] %vm635, %v935
        %v938 = vsel %vm931, %v924, %v921
        %s939 = scalar_lea.vmem [#allocation3], 24
        %v940 = vld [vmem:[%s939] sm:$0xff]
        %v942 = vsel %vm635, %v817, 0
        %944 = vmatprep.subr.mxu0 0.0
        %945 = vmatpush1.msra.mxu0 %v797
        %946 = vmatprep.subr.mxu0 0.0
        %947 = vmatpush1.msra.mxu0 %v798
        %948 = vmatprep.subr.mxu0 0.0
        %949 = vmatpush1.msra.mxu0 %v799
        %950 = vmatprep.subr.mxu0 0.0
        %951 = vmatpush1.msra.mxu0 %v800
        %952 = vmatprep.subr.mxu0 0.0
        %953 = vmatpush1.msra.mxu0 0.0
        %954 = vmatprep.subr.mxu0 0.0
        %955 = vmatpush1.msra.mxu0 0.0
        %956 = vmatprep.subr.mxu0 0.0
        %957 = vmatpush1.msra.mxu0 0.0
        %958 = vmatprep.subr.mxu0 0.0
        %959 = vmatpush1.msra.mxu0 0.0
        %960 = vmatprep.subr.mxu0 0.0
        %961 = vmatpush1.msra.mxu0 0.0
        %962 = vmatprep.subr.mxu0 0.0
        %963 = vmatpush1.msra.mxu0 0.0
        %964 = vmatprep.subr.mxu0 0.0
        %965 = vmatpush1.msra.mxu0 0.0
        %966 = vmatprep.subr.mxu0 0.0
        %967 = vmatpush1.msra.mxu0 0.0
        %968 = vmatprep.subr.mxu0 0.0
        %969 = vmatpush1.msra.mxu0 0.0
        %970 = vmatprep.subr.mxu0 0.0
        %971 = vmatpush1.msra.mxu0 0.0
        %972 = vmatprep.subr.mxu0 0.0
        %973 = vmatpush1.msra.mxu0 0.0
        %974 = vmatprep.subr.mxu0 0.0
        %975 = vmatpush1.msra.mxu0 0.0
        %976 = vmatprep.subr.mxu0 0.0
        %977 = vmatpush1.msra.mxu0 0.0
        %978 = vmatprep.subr.mxu0 0.0
        %979 = vmatpush1.msra.mxu0 0.0
        %980 = vmatprep.subr.mxu0 0.0
        %981 = vmatpush1.msra.mxu0 0.0
        %982 = vmatprep.subr.mxu0 0.0
        %983 = vmatpush1.msra.mxu0 0.0
        %984 = vmatprep.subr.mxu0 0.0
        %985 = vmatpush1.msra.mxu0 0.0
        %986 = vmatprep.subr.mxu0 0.0
        %987 = vmatpush1.msra.mxu0 0.0
        %988 = vmatprep.subr.mxu0 0.0
        %989 = vmatpush1.msra.mxu0 0.0
        %990 = vmatprep.subr.mxu0 0.0
        %991 = vmatpush1.msra.mxu0 0.0
        %992 = vmatprep.subr.mxu0 0.0
        %993 = vmatpush1.msra.mxu0 0.0
        %994 = vmatprep.subr.mxu0 0.0
        %995 = vmatpush1.msra.mxu0 0.0
        %996 = vmatprep.subr.mxu0 0.0
        %997 = vmatpush1.msra.mxu0 0.0
        %998 = vmatprep.subr.mxu0 0.0
        %999 = vmatpush1.msra.mxu0 0.0
        %1000 = vmatprep.subr.mxu0 0.0
        %1001 = vmatpush1.msra.mxu0 0.0
        %1002 = vmatprep.subr.mxu0 0.0
        %1003 = vmatpush1.msra.mxu0 0.0
        %1004 = vmatprep.subr.mxu0 0.0
        %1005 = vmatpush1.msra.mxu0 0.0
        %1006 = vmatprep.subr.mxu0 0.0
        %1007 = vmatpush1.msra.mxu0 0.0
        %1008 = vmatprep.mubr.f32.mxu0 0.0
        %1009 = vmatmul.mubr.f32.gmra.mrb[0].mxu0 %v942
        %v1010 = vpop.f32.mrb[0].mxu0
        %v1011 = vadd.f32 0.0, %v1010
        %v1012 = vpop.f32.mrb[0].mxu0
        %1013 = vdwg.mxu0
        %v1014 = vadd.f32 %v940, %v1011
        %v1015 = vxor.u32 %v1014, 2147483648
        %v1016 = vmul.f32 %v1015, 1.442695
        %v1017 = vpow.pop %v1016
        %v1018 = vadd.f32 %v1017, 1.0
        %v1019 = vrcp.pop %v1018
        %v1020 = vmul.f32 1.0, %v1019
        %1021 = vrot.lane.b32.xlu0 %v812, 64
        %v1022 = vpop.permute.xlu0 %1021
        %v1024 = vadd.f32 %v1011, %v1022
        %1026 = vrot.lane.b32.xlu0 %v1024, 64
        %v1027 = vpop.permute.xlu0 %1026
        %v1029 = vmul.f32 %v1020, %v1027
        %1031 = vrot.lane.b32.xlu0 %v1029, 64
        %v1032 = vpop.permute.xlu0 %1031
        %v1034 = vadd.f32 %v940, %v1032
        %v1035 = vtanh.pop %v1034
        %v1036 = vsub.f32 1.0, %v1020
        %1038 = vrot.lane.b32.xlu0 %v1035, 96
        %v1039 = vpop.permute.xlu0 %1038
        %v1041 = vmul.f32 %v1036, %v1039
        %1042 = vrot.lane.b32.xlu0 %v817, 32
        %v1043 = vpop.permute.xlu0 %1042
        %v1045 = vmul.f32 %v1020, %v1043
        %v1046 = vadd.f32 %v1041, %v1045
        %s1047 = sadd.s32 %s815, 3
        %v1048 = vstv %s1047
        %vm1049 = vcmp.lt.s32.totalorder %v1048, %v792
        %v1050 = vsel %vm1049, 1, 0
        %1051 = vset.pattern.permute.xlu0 0
        %1052 = vperm.xlu0 %1051, %v1050
        %v1053 = vpop.permute.xlu0 %1052
        %vm1054 = vcmp.eq.s32.totalorder %v1053, 1
        %v1055 = vsel %vm1054, %v1046, 0.0
        %1057 = vrot.lane.b32.xlu0 %v1055, 96
        %v1058 = vpop.permute.xlu0 %1057
        %s1060 = scalar_lea.vmem %s570, 24 [#allocation12]
        %1061 = vst.msk [vmem:[%s1060] sm:$0xff] %vm635, %v1058
        %v1062 = vsel %vm1054, %v1046, %v1043
        %s1063 = scalar_lea.vmem [#allocation2], 8
        %v1064 = vld [vmem:[%s1063] sm:$0xff]
        %1066 = vrot.lane.b32.xlu0 %v938, 96
        %v1067 = vpop.permute.xlu0 %1066
        %v1068 = vsel %vm635, %v1067, 0
        %1070 = vmatprep.subr.mxu0 0.0
        %1071 = vmatpush1.msra.mxu0 %v793
        %1072 = vmatprep.subr.mxu0 0.0
        %1073 = vmatpush1.msra.mxu0 %v794
        %1074 = vmatprep.subr.mxu0 0.0
        %1075 = vmatpush1.msra.mxu0 %v795
        %1076 = vmatprep.subr.mxu0 0.0
        %1077 = vmatpush1.msra.mxu0 %v796
        %1078 = vmatprep.subr.mxu0 0.0
        %1079 = vmatpush1.msra.mxu0 0.0
        %1080 = vmatprep.subr.mxu0 0.0
        %1081 = vmatpush1.msra.mxu0 0.0
        %1082 = vmatprep.subr.mxu0 0.0
        %1083 = vmatpush1.msra.mxu0 0.0
        %1084 = vmatprep.subr.mxu0 0.0
        %1085 = vmatpush1.msra.mxu0 0.0
        %1086 = vmatprep.subr.mxu0 0.0
        %1087 = vmatpush1.msra.mxu0 0.0
        %1088 = vmatprep.subr.mxu0 0.0
        %1089 = vmatpush1.msra.mxu0 0.0
        %1090 = vmatprep.subr.mxu0 0.0
        %1091 = vmatpush1.msra.mxu0 0.0
        %1092 = vmatprep.subr.mxu0 0.0
        %1093 = vmatpush1.msra.mxu0 0.0
        %1094 = vmatprep.subr.mxu0 0.0
        %1095 = vmatpush1.msra.mxu0 0.0
        %1096 = vmatprep.subr.mxu0 0.0
        %1097 = vmatpush1.msra.mxu0 0.0
        %1098 = vmatprep.subr.mxu0 0.0
        %1099 = vmatpush1.msra.mxu0 0.0
        %1100 = vmatprep.subr.mxu0 0.0
        %1101 = vmatpush1.msra.mxu0 0.0
        %1102 = vmatprep.subr.mxu0 0.0
        %1103 = vmatpush1.msra.mxu0 0.0
        %1104 = vmatprep.subr.mxu0 0.0
        %1105 = vmatpush1.msra.mxu0 0.0
        %1106 = vmatprep.subr.mxu0 0.0
        %1107 = vmatpush1.msra.mxu0 0.0
        %1108 = vmatprep.subr.mxu0 0.0
        %1109 = vmatpush1.msra.mxu0 0.0
        %1110 = vmatprep.subr.mxu0 0.0
        %1111 = vmatpush1.msra.mxu0 0.0
        %1112 = vmatprep.subr.mxu0 0.0
        %1113 = vmatpush1.msra.mxu0 0.0
        %1114 = vmatprep.subr.mxu0 0.0
        %1115 = vmatpush1.msra.mxu0 0.0
        %1116 = vmatprep.subr.mxu0 0.0
        %1117 = vmatpush1.msra.mxu0 0.0
        %1118 = vmatprep.subr.mxu0 0.0
        %1119 = vmatpush1.msra.mxu0 0.0
        %1120 = vmatprep.subr.mxu0 0.0
        %1121 = vmatpush1.msra.mxu0 0.0
        %1122 = vmatprep.subr.mxu0 0.0
        %1123 = vmatpush1.msra.mxu0 0.0
        %1124 = vmatprep.subr.mxu0 0.0
        %1125 = vmatpush1.msra.mxu0 0.0
        %1126 = vmatprep.subr.mxu0 0.0
        %1127 = vmatpush1.msra.mxu0 0.0
        %1128 = vmatprep.subr.mxu0 0.0
        %1129 = vmatpush1.msra.mxu0 0.0
        %1130 = vmatprep.subr.mxu0 0.0
        %1131 = vmatpush1.msra.mxu0 0.0
        %1132 = vmatprep.subr.mxu0 0.0
        %1133 = vmatpush1.msra.mxu0 0.0
        %1134 = vmatprep.mubr.f32.mxu0 0.0
        %1135 = vmatmul.mubr.f32.gmra.mrb[0].mxu0 %v1068
        %v1136 = vpop.f32.mrb[0].mxu0
        %v1137 = vadd.f32 0.0, %v1136
        %v1138 = vpop.f32.mrb[0].mxu0
        %1139 = vdwg.mxu0
        %v1140 = vadd.f32 %v1064, %v1137
        %v1141 = vxor.u32 %v1140, 2147483648
        %v1142 = vmul.f32 %v1141, 1.442695
        %v1143 = vpow.pop %v1142
        %v1144 = vadd.f32 %v1143, 1.0
        %v1145 = vrcp.pop %v1144
        %v1146 = vmul.f32 1.0, %v1145
        %v1147 = vadd.f32 %v1137, %v900
        %1149 = vrot.lane.b32.xlu0 %v1147, 64
        %v1150 = vpop.permute.xlu0 %1149
        %v1152 = vmul.f32 %v1146, %v1150
        %1154 = vrot.lane.b32.xlu0 %v1152, 64
        %v1155 = vpop.permute.xlu0 %1154
        %v1157 = vadd.f32 %v1064, %v1155
        %v1158 = vtanh.pop %v1157
        %v1159 = vsub.f32 1.0, %v1146
        %1161 = vrot.lane.b32.xlu0 %v1158, 96
        %v1162 = vpop.permute.xlu0 %1161
        %v1164 = vmul.f32 %v1159, %v1162
        %v1165 = vmul.f32 %v1146, %v938
        %v1166 = vadd.f32 %v1164, %v1165
        %s1167 = sadd.s32 %s813, 1
        %v1168 = vstv %s1167
        %vm1169 = vcmp.lt.s32.totalorder %v1168, %v792
        %v1170 = vsel %vm1169, 1, 0
        %1171 = vset.pattern.permute.xlu0 0
        %1172 = vperm.xlu0 %1171, %v1170
        %v1173 = vpop.permute.xlu0 %1172
        %vm1174 = vcmp.eq.s32.totalorder %v1173, 1
        %v1175 = vsel %vm1174, %v1166, 0.0
        %1177 = vrot.lane.b32.xlu0 %v1175, 96
        %v1178 = vpop.permute.xlu0 %1177
        %s1180 = scalar_lea.vmem %s563, 8 [#allocation11]
        %1181 = vst.msk [vmem:[%s1180] sm:$0xff] %vm635, %v1178
        %v1182 = vsel %vm1174, %v1166, %v938
        %s1183 = scalar_lea.vmem [#allocation3], 16
        %v1184 = vld [vmem:[%s1183] sm:$0xff]
        %1186 = vrot.lane.b32.xlu0 %v1062, 96
        %v1187 = vpop.permute.xlu0 %1186
        %v1188 = vsel %vm635, %v1187, 0
        %1190 = vmatprep.subr.mxu0 0.0
        %1191 = vmatpush1.msra.mxu0 %v797
        %1192 = vmatprep.subr.mxu0 0.0
        %1193 = vmatpush1.msra.mxu0 %v798
        %1194 = vmatprep.subr.mxu0 0.0
        %1195 = vmatpush1.msra.mxu0 %v799
        %1196 = vmatprep.subr.mxu0 0.0
        %1197 = vmatpush1.msra.mxu0 %v800
        %1198 = vmatprep.subr.mxu0 0.0
        %1199 = vmatpush1.msra.mxu0 0.0
        %1200 = vmatprep.subr.mxu0 0.0
        %1201 = vmatpush1.msra.mxu0 0.0
        %1202 = vmatprep.subr.mxu0 0.0
        %1203 = vmatpush1.msra.mxu0 0.0
        %1204 = vmatprep.subr.mxu0 0.0
        %1205 = vmatpush1.msra.mxu0 0.0
        %1206 = vmatprep.subr.mxu0 0.0
        %1207 = vmatpush1.msra.mxu0 0.0
        %1208 = vmatprep.subr.mxu0 0.0
        %1209 = vmatpush1.msra.mxu0 0.0
        %1210 = vmatprep.subr.mxu0 0.0
        %1211 = vmatpush1.msra.mxu0 0.0
        %1212 = vmatprep.subr.mxu0 0.0
        %1213 = vmatpush1.msra.mxu0 0.0
        %1214 = vmatprep.subr.mxu0 0.0
        %1215 = vmatpush1.msra.mxu0 0.0
        %1216 = vmatprep.subr.mxu0 0.0
        %1217 = vmatpush1.msra.mxu0 0.0
        %1218 = vmatprep.subr.mxu0 0.0
        %1219 = vmatpush1.msra.mxu0 0.0
        %1220 = vmatprep.subr.mxu0 0.0
        %1221 = vmatpush1.msra.mxu0 0.0
        %1222 = vmatprep.subr.mxu0 0.0
        %1223 = vmatpush1.msra.mxu0 0.0
        %1224 = vmatprep.subr.mxu0 0.0
        %1225 = vmatpush1.msra.mxu0 0.0
        %1226 = vmatprep.subr.mxu0 0.0
        %1227 = vmatpush1.msra.mxu0 0.0
        %1228 = vmatprep.subr.mxu0 0.0
        %1229 = vmatpush1.msra.mxu0 0.0
        %1230 = vmatprep.subr.mxu0 0.0
        %1231 = vmatpush1.msra.mxu0 0.0
        %1232 = vmatprep.subr.mxu0 0.0
        %1233 = vmatpush1.msra.mxu0 0.0
        %1234 = vmatprep.subr.mxu0 0.0
        %1235 = vmatpush1.msra.mxu0 0.0
        %1236 = vmatprep.subr.mxu0 0.0
        %1237 = vmatpush1.msra.mxu0 0.0
        %1238 = vmatprep.subr.mxu0 0.0
        %1239 = vmatpush1.msra.mxu0 0.0
        %1240 = vmatprep.subr.mxu0 0.0
        %1241 = vmatpush1.msra.mxu0 0.0
        %1242 = vmatprep.subr.mxu0 0.0
        %1243 = vmatpush1.msra.mxu0 0.0
        %1244 = vmatprep.subr.mxu0 0.0
        %1245 = vmatpush1.msra.mxu0 0.0
        %1246 = vmatprep.subr.mxu0 0.0
        %1247 = vmatpush1.msra.mxu0 0.0
        %1248 = vmatprep.subr.mxu0 0.0
        %1249 = vmatpush1.msra.mxu0 0.0
        %1250 = vmatprep.subr.mxu0 0.0
        %1251 = vmatpush1.msra.mxu0 0.0
        %1252 = vmatprep.subr.mxu0 0.0
        %1253 = vmatpush1.msra.mxu0 0.0
        %1254 = vmatprep.mubr.f32.mxu0 0.0
        %1255 = vmatmul.mubr.f32.gmra.mrb[0].mxu0 %v1188
        %v1256 = vpop.f32.mrb[0].mxu0
        %v1257 = vadd.f32 0.0, %v1256
        %v1258 = vpop.f32.mrb[0].mxu0
        %1259 = vdwg.mxu0
        %v1260 = vadd.f32 %v1184, %v1257
        %v1261 = vxor.u32 %v1260, 2147483648
        %v1262 = vmul.f32 %v1261, 1.442695
        %v1263 = vpow.pop %v1262
        %v1264 = vadd.f32 %v1263, 1.0
        %v1265 = vrcp.pop %v1264
        %v1266 = vmul.f32 1.0, %v1265
        %v1267 = vadd.f32 %v1257, %v1022
        %1269 = vrot.lane.b32.xlu0 %v1267, 64
        %v1270 = vpop.permute.xlu0 %1269
        %v1272 = vmul.f32 %v1266, %v1270
        %1274 = vrot.lane.b32.xlu0 %v1272, 64
        %v1275 = vpop.permute.xlu0 %1274
        %v1277 = vadd.f32 %v1184, %v1275
        %v1278 = vtanh.pop %v1277
        %v1279 = vsub.f32 1.0, %v1266
        %1281 = vrot.lane.b32.xlu0 %v1278, 96
        %v1282 = vpop.permute.xlu0 %1281
        %v1284 = vmul.f32 %v1279, %v1282
        %v1285 = vmul.f32 %v1266, %v1062
        %v1286 = vadd.f32 %v1284, %v1285
        %s1287 = sadd.s32 %s815, 2
        %v1288 = vstv %s1287
        %vm1289 = vcmp.lt.s32.totalorder %v1288, %v792
        %v1290 = vsel %vm1289, 1, 0
        %1291 = vset.pattern.permute.xlu0 0
        %1292 = vperm.xlu0 %1291, %v1290
        %v1293 = vpop.permute.xlu0 %1292
        %vm1294 = vcmp.eq.s32.totalorder %v1293, 1
        %v1295 = vsel %vm1294, %v1286, 0.0
        %1297 = vrot.lane.b32.xlu0 %v1295, 96
        %v1298 = vpop.permute.xlu0 %1297
        %s1300 = scalar_lea.vmem %s570, 16 [#allocation12]
        %1301 = vst.msk [vmem:[%s1300] sm:$0xff] %vm635, %v1298
        %v1302 = vsel %vm1294, %v1286, %v1062
        %s1303 = scalar_lea.vmem [#allocation2], 16
        %v1304 = vld [vmem:[%s1303] sm:$0xff]
        %1306 = vrot.lane.b32.xlu0 %v1182, 96
        %v1307 = vpop.permute.xlu0 %1306
        %v1308 = vsel %vm635, %v1307, 0
        %1310 = vmatprep.subr.mxu0 0.0
        %1311 = vmatpush1.msra.mxu0 %v793
        %1312 = vmatprep.subr.mxu0 0.0
        %1313 = vmatpush1.msra.mxu0 %v794
        %1314 = vmatprep.subr.mxu0 0.0
        %1315 = vmatpush1.msra.mxu0 %v795
        %1316 = vmatprep.subr.mxu0 0.0
        %1317 = vmatpush1.msra.mxu0 %v796
        %1318 = vmatprep.subr.mxu0 0.0
        %1319 = vmatpush1.msra.mxu0 0.0
        %1320 = vmatprep.subr.mxu0 0.0
        %1321 = vmatpush1.msra.mxu0 0.0
        %1322 = vmatprep.subr.mxu0 0.0
        %1323 = vmatpush1.msra.mxu0 0.0
        %1324 = vmatprep.subr.mxu0 0.0
        %1325 = vmatpush1.msra.mxu0 0.0
        %1326 = vmatprep.subr.mxu0 0.0
        %1327 = vmatpush1.msra.mxu0 0.0
        %1328 = vmatprep.subr.mxu0 0.0
        %1329 = vmatpush1.msra.mxu0 0.0
        %1330 = vmatprep.subr.mxu0 0.0
        %1331 = vmatpush1.msra.mxu0 0.0
        %1332 = vmatprep.subr.mxu0 0.0
        %1333 = vmatpush1.msra.mxu0 0.0
        %1334 = vmatprep.subr.mxu0 0.0
        %1335 = vmatpush1.msra.mxu0 0.0
        %1336 = vmatprep.subr.mxu0 0.0
        %1337 = vmatpush1.msra.mxu0 0.0
        %1338 = vmatprep.subr.mxu0 0.0
        %1339 = vmatpush1.msra.mxu0 0.0
        %1340 = vmatprep.subr.mxu0 0.0
        %1341 = vmatpush1.msra.mxu0 0.0
        %1342 = vmatprep.subr.mxu0 0.0
        %1343 = vmatpush1.msra.mxu0 0.0
        %1344 = vmatprep.subr.mxu0 0.0
        %1345 = vmatpush1.msra.mxu0 0.0
        %1346 = vmatprep.subr.mxu0 0.0
        %1347 = vmatpush1.msra.mxu0 0.0
        %1348 = vmatprep.subr.mxu0 0.0
        %1349 = vmatpush1.msra.mxu0 0.0
        %1350 = vmatprep.subr.mxu0 0.0
        %1351 = vmatpush1.msra.mxu0 0.0
        %1352 = vmatprep.subr.mxu0 0.0
        %1353 = vmatpush1.msra.mxu0 0.0
        %1354 = vmatprep.subr.mxu0 0.0
        %1355 = vmatpush1.msra.mxu0 0.0
        %1356 = vmatprep.subr.mxu0 0.0
        %1357 = vmatpush1.msra.mxu0 0.0
        %1358 = vmatprep.subr.mxu0 0.0
        %1359 = vmatpush1.msra.mxu0 0.0
        %1360 = vmatprep.subr.mxu0 0.0
        %1361 = vmatpush1.msra.mxu0 0.0
        %1362 = vmatprep.subr.mxu0 0.0
        %1363 = vmatpush1.msra.mxu0 0.0
        %1364 = vmatprep.subr.mxu0 0.0
        %1365 = vmatpush1.msra.mxu0 0.0
        %1366 = vmatprep.subr.mxu0 0.0
        %1367 = vmatpush1.msra.mxu0 0.0
        %1368 = vmatprep.subr.mxu0 0.0
        %1369 = vmatpush1.msra.mxu0 0.0
        %1370 = vmatprep.subr.mxu0 0.0
        %1371 = vmatpush1.msra.mxu0 0.0
        %1372 = vmatprep.subr.mxu0 0.0
        %1373 = vmatpush1.msra.mxu0 0.0
        %1374 = vmatprep.mubr.f32.mxu0 0.0
        %1375 = vmatmul.mubr.f32.gmra.mrb[0].mxu0 %v1308
        %v1376 = vpop.f32.mrb[0].mxu0
        %v1377 = vadd.f32 0.0, %v1376
        %v1378 = vpop.f32.mrb[0].mxu0
        %1379 = vdwg.mxu0
        %v1380 = vadd.f32 %v1304, %v1377
        %v1381 = vxor.u32 %v1380, 2147483648
        %v1382 = vmul.f32 %v1381, 1.442695
        %v1383 = vpow.pop %v1382
        %v1384 = vadd.f32 %v1383, 1.0
        %v1385 = vrcp.pop %v1384
        %v1386 = vmul.f32 1.0, %v1385
        %v1387 = vadd.f32 %v1377, %v900
        %1389 = vrot.lane.b32.xlu0 %v1387, 64
        %v1390 = vpop.permute.xlu0 %1389
        %v1392 = vmul.f32 %v1386, %v1390
        %1394 = vrot.lane.b32.xlu0 %v1392, 64
        %v1395 = vpop.permute.xlu0 %1394
        %v1397 = vadd.f32 %v1304, %v1395
        %v1398 = vtanh.pop %v1397
        %v1399 = vsub.f32 1.0, %v1386
        %1401 = vrot.lane.b32.xlu0 %v1398, 96
        %v1402 = vpop.permute.xlu0 %1401
        %v1404 = vmul.f32 %v1399, %v1402
        %v1405 = vmul.f32 %v1386, %v1182
        %v1406 = vadd.f32 %v1404, %v1405
        %s1407 = sadd.s32 %s813, 2
        %v1408 = vstv %s1407
        %vm1409 = vcmp.lt.s32.totalorder %v1408, %v792
        %v1410 = vsel %vm1409, 1, 0
        %1411 = vset.pattern.permute.xlu0 0
        %1412 = vperm.xlu0 %1411, %v1410
        %v1413 = vpop.permute.xlu0 %1412
        %vm1414 = vcmp.eq.s32.totalorder %v1413, 1
        %v1415 = vsel %vm1414, %v1406, 0.0
        %1417 = vrot.lane.b32.xlu0 %v1415, 96
        %v1418 = vpop.permute.xlu0 %1417
        %s1420 = scalar_lea.vmem %s563, 16 [#allocation11]
        %1421 = vst.msk [vmem:[%s1420] sm:$0xff] %vm635, %v1418
        %v1422 = vsel %vm1414, %v1406, %v1182
        %s1423 = scalar_lea.vmem [#allocation3], 8
        %v1424 = vld [vmem:[%s1423] sm:$0xff]
        %1426 = vrot.lane.b32.xlu0 %v1302, 96
        %v1427 = vpop.permute.xlu0 %1426
        %v1428 = vsel %vm635, %v1427, 0
        %1430 = vmatprep.subr.mxu0 0.0
        %1431 = vmatpush1.msra.mxu0 %v797
        %1432 = vmatprep.subr.mxu0 0.0
        %1433 = vmatpush1.msra.mxu0 %v798
        %1434 = vmatprep.subr.mxu0 0.0
        %1435 = vmatpush1.msra.mxu0 %v799
        %1436 = vmatprep.subr.mxu0 0.0
        %1437 = vmatpush1.msra.mxu0 %v800
        %1438 = vmatprep.subr.mxu0 0.0
        %1439 = vmatpush1.msra.mxu0 0.0
        %1440 = vmatprep.subr.mxu0 0.0
        %1441 = vmatpush1.msra.mxu0 0.0
        %1442 = vmatprep.subr.mxu0 0.0
        %1443 = vmatpush1.msra.mxu0 0.0
        %1444 = vmatprep.subr.mxu0 0.0
        %1445 = vmatpush1.msra.mxu0 0.0
        %1446 = vmatprep.subr.mxu0 0.0
        %1447 = vmatpush1.msra.mxu0 0.0
        %1448 = vmatprep.subr.mxu0 0.0
        %1449 = vmatpush1.msra.mxu0 0.0
        %1450 = vmatprep.subr.mxu0 0.0
        %1451 = vmatpush1.msra.mxu0 0.0
        %1452 = vmatprep.subr.mxu0 0.0
        %1453 = vmatpush1.msra.mxu0 0.0
        %1454 = vmatprep.subr.mxu0 0.0
        %1455 = vmatpush1.msra.mxu0 0.0
        %1456 = vmatprep.subr.mxu0 0.0
        %1457 = vmatpush1.msra.mxu0 0.0
        %1458 = vmatprep.subr.mxu0 0.0
        %1459 = vmatpush1.msra.mxu0 0.0
        %1460 = vmatprep.subr.mxu0 0.0
        %1461 = vmatpush1.msra.mxu0 0.0
        %1462 = vmatprep.subr.mxu0 0.0
        %1463 = vmatpush1.msra.mxu0 0.0
        %1464 = vmatprep.subr.mxu0 0.0
        %1465 = vmatpush1.msra.mxu0 0.0
        %1466 = vmatprep.subr.mxu0 0.0
        %1467 = vmatpush1.msra.mxu0 0.0
        %1468 = vmatprep.subr.mxu0 0.0
        %1469 = vmatpush1.msra.mxu0 0.0
        %1470 = vmatprep.subr.mxu0 0.0
        %1471 = vmatpush1.msra.mxu0 0.0
        %1472 = vmatprep.subr.mxu0 0.0
        %1473 = vmatpush1.msra.mxu0 0.0
        %1474 = vmatprep.subr.mxu0 0.0
        %1475 = vmatpush1.msra.mxu0 0.0
        %1476 = vmatprep.subr.mxu0 0.0
        %1477 = vmatpush1.msra.mxu0 0.0
        %1478 = vmatprep.subr.mxu0 0.0
        %1479 = vmatpush1.msra.mxu0 0.0
        %1480 = vmatprep.subr.mxu0 0.0
        %1481 = vmatpush1.msra.mxu0 0.0
        %1482 = vmatprep.subr.mxu0 0.0
        %1483 = vmatpush1.msra.mxu0 0.0
        %1484 = vmatprep.subr.mxu0 0.0
        %1485 = vmatpush1.msra.mxu0 0.0
        %1486 = vmatprep.subr.mxu0 0.0
        %1487 = vmatpush1.msra.mxu0 0.0
        %1488 = vmatprep.subr.mxu0 0.0
        %1489 = vmatpush1.msra.mxu0 0.0
        %1490 = vmatprep.subr.mxu0 0.0
        %1491 = vmatpush1.msra.mxu0 0.0
        %1492 = vmatprep.subr.mxu0 0.0
        %1493 = vmatpush1.msra.mxu0 0.0
        %1494 = vmatprep.mubr.f32.mxu0 0.0
        %1495 = vmatmul.mubr.f32.gmra.mrb[0].mxu0 %v1428
        %v1496 = vpop.f32.mrb[0].mxu0
        %v1497 = vadd.f32 0.0, %v1496
        %v1498 = vpop.f32.mrb[0].mxu0
        %1499 = vdwg.mxu0
        %v1500 = vadd.f32 %v1424, %v1497
        %v1501 = vxor.u32 %v1500, 2147483648
        %v1502 = vmul.f32 %v1501, 1.442695
        %v1503 = vpow.pop %v1502
        %v1504 = vadd.f32 %v1503, 1.0
        %v1505 = vrcp.pop %v1504
        %v1506 = vmul.f32 1.0, %v1505
        %v1507 = vadd.f32 %v1497, %v1022
        %1509 = vrot.lane.b32.xlu0 %v1507, 64
        %v1510 = vpop.permute.xlu0 %1509
        %v1512 = vmul.f32 %v1506, %v1510
        %1514 = vrot.lane.b32.xlu0 %v1512, 64
        %v1515 = vpop.permute.xlu0 %1514
        %v1517 = vadd.f32 %v1424, %v1515
        %v1518 = vtanh.pop %v1517
        %v1519 = vsub.f32 1.0, %v1506
        %1521 = vrot.lane.b32.xlu0 %v1518, 96
        %v1522 = vpop.permute.xlu0 %1521
        %v1524 = vmul.f32 %v1519, %v1522
        %v1525 = vmul.f32 %v1506, %v1302
        %v1526 = vadd.f32 %v1524, %v1525
        %s1527 = sadd.s32 %s815, 1
        %v1528 = vstv %s1527
        %vm1529 = vcmp.lt.s32.totalorder %v1528, %v792
        %v1530 = vsel %vm1529, 1, 0
        %1531 = vset.pattern.permute.xlu0 0
        %1532 = vperm.xlu0 %1531, %v1530
        %v1533 = vpop.permute.xlu0 %1532
        %vm1534 = vcmp.eq.s32.totalorder %v1533, 1
        %v1535 = vsel %vm1534, %v1526, 0.0
        %1537 = vrot.lane.b32.xlu0 %v1535, 96
        %v1538 = vpop.permute.xlu0 %1537
        %s1540 = scalar_lea.vmem %s570, 8 [#allocation12]
        %1541 = vst.msk [vmem:[%s1540] sm:$0xff] %vm635, %v1538
        %v1542 = vsel %vm1534, %v1526, %v1302
        %s1543 = scalar_lea.vmem [#allocation2], 24
        %v1544 = vld [vmem:[%s1543] sm:$0xff]
        %1546 = vrot.lane.b32.xlu0 %v1422, 96
        %v1547 = vpop.permute.xlu0 %1546
        %v1548 = vsel %vm635, %v1547, 0
        %1550 = vmatprep.subr.mxu0 0.0
        %1551 = vmatpush1.msra.mxu0 %v793
        %1552 = vmatprep.subr.mxu0 0.0
        %1553 = vmatpush1.msra.mxu0 %v794
        %1554 = vmatprep.subr.mxu0 0.0
        %1555 = vmatpush1.msra.mxu0 %v795
        %1556 = vmatprep.subr.mxu0 0.0
        %1557 = vmatpush1.msra.mxu0 %v796
        %1558 = vmatprep.subr.mxu0 0.0
        %1559 = vmatpush1.msra.mxu0 0.0
        %1560 = vmatprep.subr.mxu0 0.0
        %1561 = vmatpush1.msra.mxu0 0.0
        %1562 = vmatprep.subr.mxu0 0.0
        %1563 = vmatpush1.msra.mxu0 0.0
        %1564 = vmatprep.subr.mxu0 0.0
        %1565 = vmatpush1.msra.mxu0 0.0
        %1566 = vmatprep.subr.mxu0 0.0
        %1567 = vmatpush1.msra.mxu0 0.0
        %1568 = vmatprep.subr.mxu0 0.0
        %1569 = vmatpush1.msra.mxu0 0.0
        %1570 = vmatprep.subr.mxu0 0.0
        %1571 = vmatpush1.msra.mxu0 0.0
        %1572 = vmatprep.subr.mxu0 0.0
        %1573 = vmatpush1.msra.mxu0 0.0
        %1574 = vmatprep.subr.mxu0 0.0
        %1575 = vmatpush1.msra.mxu0 0.0
        %1576 = vmatprep.subr.mxu0 0.0
        %1577 = vmatpush1.msra.mxu0 0.0
        %1578 = vmatprep.subr.mxu0 0.0
        %1579 = vmatpush1.msra.mxu0 0.0
        %1580 = vmatprep.subr.mxu0 0.0
        %1581 = vmatpush1.msra.mxu0 0.0
        %1582 = vmatprep.subr.mxu0 0.0
        %1583 = vmatpush1.msra.mxu0 0.0
        %1584 = vmatprep.subr.mxu0 0.0
        %1585 = vmatpush1.msra.mxu0 0.0
        %1586 = vmatprep.subr.mxu0 0.0
        %1587 = vmatpush1.msra.mxu0 0.0
        %1588 = vmatprep.subr.mxu0 0.0
        %1589 = vmatpush1.msra.mxu0 0.0
        %1590 = vmatprep.subr.mxu0 0.0
        %1591 = vmatpush1.msra.mxu0 0.0
        %1592 = vmatprep.subr.mxu0 0.0
        %1593 = vmatpush1.msra.mxu0 0.0
        %1594 = vmatprep.subr.mxu0 0.0
        %1595 = vmatpush1.msra.mxu0 0.0
        %1596 = vmatprep.subr.mxu0 0.0
        %1597 = vmatpush1.msra.mxu0 0.0
        %1598 = vmatprep.subr.mxu0 0.0
        %1599 = vmatpush1.msra.mxu0 0.0
        %1600 = vmatprep.subr.mxu0 0.0
        %1601 = vmatpush1.msra.mxu0 0.0
        %1602 = vmatprep.subr.mxu0 0.0
        %1603 = vmatpush1.msra.mxu0 0.0
        %1604 = vmatprep.subr.mxu0 0.0
        %1605 = vmatpush1.msra.mxu0 0.0
        %1606 = vmatprep.subr.mxu0 0.0
        %1607 = vmatpush1.msra.mxu0 0.0
        %1608 = vmatprep.subr.mxu0 0.0
        %1609 = vmatpush1.msra.mxu0 0.0
        %1610 = vmatprep.subr.mxu0 0.0
        %1611 = vmatpush1.msra.mxu0 0.0
        %1612 = vmatprep.subr.mxu0 0.0
        %1613 = vmatpush1.msra.mxu0 0.0
        %1614 = vmatprep.mubr.f32.mxu0 0.0
        %1615 = vmatmul.mubr.f32.gmra.mrb[0].mxu0 %v1548
        %v1616 = vpop.f32.mrb[0].mxu0
        %v1617 = vadd.f32 0.0, %v1616
        %v1618 = vpop.f32.mrb[0].mxu0
        %1619 = vdwg.mxu0
        %v1620 = vadd.f32 %v1544, %v1617
        %v1621 = vxor.u32 %v1620, 2147483648
        %v1622 = vmul.f32 %v1621, 1.442695
        %v1623 = vpow.pop %v1622
        %v1624 = vadd.f32 %v1623, 1.0
        %v1625 = vrcp.pop %v1624
        %v1626 = vmul.f32 1.0, %v1625
        %v1627 = vadd.f32 %v1617, %v900
        %1629 = vrot.lane.b32.xlu0 %v1627, 64
        %v1630 = vpop.permute.xlu0 %1629
        %v1632 = vmul.f32 %v1626, %v1630
        %1634 = vrot.lane.b32.xlu0 %v1632, 64
        %v1635 = vpop.permute.xlu0 %1634
        %v1637 = vadd.f32 %v1544, %v1635
        %v1638 = vtanh.pop %v1637
        %v1639 = vsub.f32 1.0, %v1626
        %1641 = vrot.lane.b32.xlu0 %v1638, 96
        %v1642 = vpop.permute.xlu0 %1641
        %v1644 = vmul.f32 %v1639, %v1642
        %v1645 = vmul.f32 %v1626, %v1422
        %v1646 = vadd.f32 %v1644, %v1645
        %s1647 = sadd.s32 %s813, 3
        %v1648 = vstv %s1647
        %vm1649 = vcmp.lt.s32.totalorder %v1648, %v792
        %v1650 = vsel %vm1649, 1, 0
        %1651 = vset.pattern.permute.xlu0 0
        %1652 = vperm.xlu0 %1651, %v1650
        %v1653 = vpop.permute.xlu0 %1652
        %vm1654 = vcmp.eq.s32.totalorder %v1653, 1
        %v1655 = vsel %vm1654, %v1646, 0.0
        %1657 = vrot.lane.b32.xlu0 %v1655, 96
        %v1658 = vpop.permute.xlu0 %1657
        %s1660 = scalar_lea.vmem %s563, 24 [#allocation11]
        %1661 = vst.msk [vmem:[%s1660] sm:$0xff] %vm635, %v1658
        %v1662 = vsel %vm1654, %v1646, %v1422
        %v1663 = vld [vmem:[#allocation3] sm:$0xff]
        %1665 = vrot.lane.b32.xlu0 %v1542, 96
        %v1666 = vpop.permute.xlu0 %1665
        %v1667 = vsel %vm635, %v1666, 0
        %1669 = vmatprep.subr.mxu0 0.0
        %1670 = vmatpush1.msra.mxu0 %v797
        %1671 = vmatprep.subr.mxu0 0.0
        %1672 = vmatpush1.msra.mxu0 %v798
        %1673 = vmatprep.subr.mxu0 0.0
        %1674 = vmatpush1.msra.mxu0 %v799
        %1675 = vmatprep.subr.mxu0 0.0
        %1676 = vmatpush1.msra.mxu0 %v800
        %1677 = vmatprep.subr.mxu0 0.0
        %1678 = vmatpush1.msra.mxu0 0.0
        %1679 = vmatprep.subr.mxu0 0.0
        %1680 = vmatpush1.msra.mxu0 0.0
        %1681 = vmatprep.subr.mxu0 0.0
        %1682 = vmatpush1.msra.mxu0 0.0
        %1683 = vmatprep.subr.mxu0 0.0
        %1684 = vmatpush1.msra.mxu0 0.0
        %1685 = vmatprep.subr.mxu0 0.0
        %1686 = vmatpush1.msra.mxu0 0.0
        %1687 = vmatprep.subr.mxu0 0.0
        %1688 = vmatpush1.msra.mxu0 0.0
        %1689 = vmatprep.subr.mxu0 0.0
        %1690 = vmatpush1.msra.mxu0 0.0
        %1691 = vmatprep.subr.mxu0 0.0
        %1692 = vmatpush1.msra.mxu0 0.0
        %1693 = vmatprep.subr.mxu0 0.0
        %1694 = vmatpush1.msra.mxu0 0.0
        %1695 = vmatprep.subr.mxu0 0.0
        %1696 = vmatpush1.msra.mxu0 0.0
        %1697 = vmatprep.subr.mxu0 0.0
        %1698 = vmatpush1.msra.mxu0 0.0
        %1699 = vmatprep.subr.mxu0 0.0
        %1700 = vmatpush1.msra.mxu0 0.0
        %1701 = vmatprep.subr.mxu0 0.0
        %1702 = vmatpush1.msra.mxu0 0.0
        %1703 = vmatprep.subr.mxu0 0.0
        %1704 = vmatpush1.msra.mxu0 0.0
        %1705 = vmatprep.subr.mxu0 0.0
        %1706 = vmatpush1.msra.mxu0 0.0
        %1707 = vmatprep.subr.mxu0 0.0
        %1708 = vmatpush1.msra.mxu0 0.0
        %1709 = vmatprep.subr.mxu0 0.0
        %1710 = vmatpush1.msra.mxu0 0.0
        %1711 = vmatprep.subr.mxu0 0.0
        %1712 = vmatpush1.msra.mxu0 0.0
        %1713 = vmatprep.subr.mxu0 0.0
        %1714 = vmatpush1.msra.mxu0 0.0
        %1715 = vmatprep.subr.mxu0 0.0
        %1716 = vmatpush1.msra.mxu0 0.0
        %1717 = vmatprep.subr.mxu0 0.0
        %1718 = vmatpush1.msra.mxu0 0.0
        %1719 = vmatprep.subr.mxu0 0.0
        %1720 = vmatpush1.msra.mxu0 0.0
        %1721 = vmatprep.subr.mxu0 0.0
        %1722 = vmatpush1.msra.mxu0 0.0
        %1723 = vmatprep.subr.mxu0 0.0
        %1724 = vmatpush1.msra.mxu0 0.0
        %1725 = vmatprep.subr.mxu0 0.0
        %1726 = vmatpush1.msra.mxu0 0.0
        %1727 = vmatprep.subr.mxu0 0.0
        %1728 = vmatpush1.msra.mxu0 0.0
        %1729 = vmatprep.subr.mxu0 0.0
        %1730 = vmatpush1.msra.mxu0 0.0
        %1731 = vmatprep.subr.mxu0 0.0
        %1732 = vmatpush1.msra.mxu0 0.0
        %1733 = vmatprep.mubr.f32.mxu0 0.0
        %1734 = vmatmul.mubr.f32.gmra.mrb[0].mxu0 %v1667
        %v1735 = vpop.f32.mrb[0].mxu0
        %v1736 = vadd.f32 0.0, %v1735
        %v1737 = vpop.f32.mrb[0].mxu0
        %1738 = vdwg.mxu0
        %v1739 = vadd.f32 %v1663, %v1736
        %v1740 = vxor.u32 %v1739, 2147483648
        %v1741 = vmul.f32 %v1740, 1.442695
        %v1742 = vpow.pop %v1741
        %v1743 = vadd.f32 %v1742, 1.0
        %v1744 = vrcp.pop %v1743
        %v1745 = vmul.f32 1.0, %v1744
        %v1746 = vadd.f32 %v1736, %v1022
        %1748 = vrot.lane.b32.xlu0 %v1746, 64
        %v1749 = vpop.permute.xlu0 %1748
        %v1751 = vmul.f32 %v1745, %v1749
        %1753 = vrot.lane.b32.xlu0 %v1751, 64
        %v1754 = vpop.permute.xlu0 %1753
        %v1756 = vadd.f32 %v1663, %v1754
        %v1757 = vtanh.pop %v1756
        %v1758 = vsub.f32 1.0, %v1745
        %1760 = vrot.lane.b32.xlu0 %v1757, 96
        %v1761 = vpop.permute.xlu0 %1760
        %v1763 = vmul.f32 %v1758, %v1761
        %v1764 = vmul.f32 %v1745, %v1542
        %v1765 = vadd.f32 %v1763, %v1764
        %v1766 = vstv %s815
        %vm1767 = vcmp.lt.s32.totalorder %v1766, %v792
        %v1768 = vsel %vm1767, 1, 0
        %1769 = vset.pattern.permute.xlu0 0
        %1770 = vperm.xlu0 %1769, %v1768
        %v1771 = vpop.permute.xlu0 %1770
        %vm1772 = vcmp.eq.s32.totalorder %v1771, 1
        %v1773 = vsel %vm1772, %v1765, 0.0
        %1775 = vrot.lane.b32.xlu0 %v1773, 96
        %v1776 = vpop.permute.xlu0 %1775
        %1778 = vst.msk [vmem:[%s570] sm:$0xff] %vm635, %v1776
        %v1779 = vsel %vm1772, %v1765, %v1542
        %1781 = vrot.lane.b32.xlu0 %v1662, 96
        %v1782 = vpop.permute.xlu0 %1781
        %1784 = vst.msk [vmem:[#allocation4] sm:$0xff] %vm635, %v1782
        %1786 = vrot.lane.b32.xlu0 %v1779, 96
        %v1787 = vpop.permute.xlu0 %1786
        %1789 = vst.msk [vmem:[#allocation5] sm:$0xff] %vm635, %v1787
        %p1790 = scmp.eq.s32.totalorder %s36, 1
        // Predicated region
        $region89: #{tpu_custom_call.1} parent=75 // pred_check
          %p1791 = pneg %p1790
        $region90: #{tpu_custom_call.1} parent=75 // pred_check_branch
          %1793 = sbr.rel (%p1791) target = $region92
        $region91: #{tpu_custom_call.1} parent=75 // pred_region
          %v1794 = vpack.c.bf16 %v1662, %v1662
          %v1795 = vld [vmem:[%s11] sm:$0xf]
          %v1796 = vld [vmem:[%s11 + $0x4] sm:$0xf]
          %v1797 = vld [vmem:[%s11 + $0x8] sm:$0xf]
          %v1798 = vld [vmem:[%s11 + $0xc] sm:$0xf]
          %v1799 = vpack.c.bf16 %v1779, %v1779
          %v1800 = vld [vmem:[%s12] sm:$0xf]
          %v1801 = vld [vmem:[%s12 + $0x4] sm:$0xf]
          %v1802 = vld [vmem:[%s12 + $0x8] sm:$0xf]
          %v1803 = vld [vmem:[%s12 + $0xc] sm:$0xf]
          %1805 = vrot.lane.b32.xlu0 %v1799, 96
          %v1806 = vpop.permute.xlu0 %1805
          %v1811 = vunpack.c.l.b16 %v1800
          %v1812 = vunpack.c.l.b16 %v1801
          %v1813 = vunpack.c.l.b16 %v1802
          %v1814 = vunpack.c.l.b16 %v1803
          %v1815 = vpack.c.b16 %v1812, %v1811
          %v1816 = vpack.c.b16 %v1814, %v1813
          %v1820 = vsel %vm635, %v1806, 0
          %1822 = vmatprep.subr.bf16.mxu0 0
          %1823 = vmatpush1.bf16.msra.mxu0 %v1815
          %1824 = vmatprep.subr.bf16.mxu0 0
          %1825 = vmatpush1.bf16.msra.mxu0 %v1816
          %1826 = vmatprep.subr.bf16.mxu0 0
          %1827 = vmatpush1.bf16.msra.mxu0 0
          %1828 = vmatprep.subr.bf16.mxu0 0
          %1829 = vmatpush1.bf16.msra.mxu0 0
          %1830 = vmatprep.subr.bf16.mxu0 0
          %1831 = vmatpush1.bf16.msra.mxu0 0
          %1832 = vmatprep.subr.bf16.mxu0 0
          %1833 = vmatpush1.bf16.msra.mxu0 0
          %1834 = vmatprep.subr.bf16.mxu0 0
          %1835 = vmatpush1.bf16.msra.mxu0 0
          %1836 = vmatprep.subr.bf16.mxu0 0
          %1837 = vmatpush1.bf16.msra.mxu0 0
          %1838 = vmatprep.subr.bf16.mxu0 0
          %1839 = vmatpush1.bf16.msra.mxu0 0
          %1840 = vmatprep.subr.bf16.mxu0 0
          %1841 = vmatpush1.bf16.msra.mxu0 0
          %1842 = vmatprep.subr.bf16.mxu0 0
          %1843 = vmatpush1.bf16.msra.mxu0 0
          %1844 = vmatprep.subr.bf16.mxu0 0
          %1845 = vmatpush1.bf16.msra.mxu0 0
          %1846 = vmatprep.subr.bf16.mxu0 0
          %1847 = vmatpush1.bf16.msra.mxu0 0
          %1848 = vmatprep.subr.bf16.mxu0 0
          %1849 = vmatpush1.bf16.msra.mxu0 0
          %1850 = vmatprep.subr.bf16.mxu0 0
          %1851 = vmatpush1.bf16.msra.mxu0 0
          %1852 = vmatprep.subr.bf16.mxu0 0
          %1853 = vmatpush1.bf16.msra.mxu0 0
          %1854 = vmatprep.mubr.bf16.mxu0 0
          %1855 = vmatmul.mubr.bf16.gmra.mrb[0].mxu0 %v1820
          %v1856 = vpop.f32.mrb[0].mxu0
          %v1857 = vadd.f32 0.0, %v1856
          %v1858 = vpop.f32.mrb[0].mxu0
          %v1859 = vpop.f32.mrb[0].mxu0
          %v1860 = vpop.f32.mrb[0].mxu0
          %1861 = vdwg.mxu0
          %1863 = vrot.lane.b32.xlu0 %v1794, 96
          %v1864 = vpop.permute.xlu0 %1863
          %v1869 = vunpack.c.l.b16 %v1795
          %v1870 = vunpack.c.l.b16 %v1796
          %v1871 = vunpack.c.l.b16 %v1797
          %v1872 = vunpack.c.l.b16 %v1798
          %v1873 = vpack.c.b16 %v1870, %v1869
          %v1874 = vpack.c.b16 %v1872, %v1871
          %v1878 = vsel %vm635, %v1864, 0
          %1880 = vmatprep.subr.bf16.mxu0 0
          %1881 = vmatpush1.bf16.msra.mxu0 %v1873
          %1882 = vmatprep.subr.bf16.mxu0 0
          %1883 = vmatpush1.bf16.msra.mxu0 %v1874
          %1884 = vmatprep.subr.bf16.mxu0 0
          %1885 = vmatpush1.bf16.msra.mxu0 0
          %1886 = vmatprep.subr.bf16.mxu0 0
          %1887 = vmatpush1.bf16.msra.mxu0 0
          %1888 = vmatprep.subr.bf16.mxu0 0
          %1889 = vmatpush1.bf16.msra.mxu0 0
          %1890 = vmatprep.subr.bf16.mxu0 0
          %1891 = vmatpush1.bf16.msra.mxu0 0
          %1892 = vmatprep.subr.bf16.mxu0 0
          %1893 = vmatpush1.bf16.msra.mxu0 0
          %1894 = vmatprep.subr.bf16.mxu0 0
          %1895 = vmatpush1.bf16.msra.mxu0 0
          %1896 = vmatprep.subr.bf16.mxu0 0
          %1897 = vmatpush1.bf16.msra.mxu0 0
          %1898 = vmatprep.subr.bf16.mxu0 0
          %1899 = vmatpush1.bf16.msra.mxu0 0
          %1900 = vmatprep.subr.bf16.mxu0 0
          %1901 = vmatpush1.bf16.msra.mxu0 0
          %1902 = vmatprep.subr.bf16.mxu0 0
          %1903 = vmatpush1.bf16.msra.mxu0 0
          %1904 = vmatprep.subr.bf16.mxu0 0
          %1905 = vmatpush1.bf16.msra.mxu0 0
          %1906 = vmatprep.subr.bf16.mxu0 0
          %1907 = vmatpush1.bf16.msra.mxu0 0
          %1908 = vmatprep.subr.bf16.mxu0 0
          %1909 = vmatpush1.bf16.msra.mxu0 0
          %1910 = vmatprep.subr.bf16.mxu0 0
          %1911 = vmatpush1.bf16.msra.mxu0 0
          %1912 = vmatprep.mubr.bf16.mxu0 0
          %1913 = vmatmul.mubr.bf16.gmra.mrb[0].mxu0 %v1878
          %v1914 = vpop.f32.mrb[0].mxu0
          %v1915 = vadd.f32 %v1857, %v1914
          %v1916 = vpop.f32.mrb[0].mxu0
          %v1917 = vpop.f32.mrb[0].mxu0
          %v1918 = vpop.f32.mrb[0].mxu0
          %1919 = vdwg.mxu0
          %v1920 = vld [vmem:[%s13] sm:$0x1]
          %v1922 = vlaneseq
          %v1923 = vshrl.u32 %v1922, 7
          %v1924 = vsub.s32 0, %v1923
          %v1925 = vrot.slane %v1920, %v1924
          %v1927 = vadd.f32 %v1915, %v1925
          %v1928 = vtanh.pop %v1927
          %1929 = vst.msk [vmem:[#allocation14] sm:$0xff] %vm635, %v1928
        $region92: #{tpu_custom_call.1} parent=75 // pred_fallthru
          _
        %s1930 = sand.u32 %s350, 1
        %s1931 = scalar_lea.sflag [#allocation8], %s1930
        %s1932 = sand.u32 %s350, 1
        %s1933 = smul.addr %s1932, 32
        %s1934 = scalar_lea.vmem [#allocation11], %s1933
        %s1935 = sand.u32 %s36, 1
        %s1936 = scalar_lea.sflag [#allocation13], %s1935
        %s1937 = sand.u32 %s378, 1
        %s1938 = smul.addr %s1937, 32
        %s1939 = scalar_lea.vmem [#allocation12], %s1938
        // Predicated region
        $region93: #{tpu_custom_call.1} parent=75 // pred_check
          %p1940 = pneg %p360
        $region94: #{tpu_custom_call.1} parent=75 // pred_check_branch
          %1942 = sbr.rel (%p1940) target = $region96
        $region95: #{tpu_custom_call.1} parent=75 // pred_region
          %s1943 = smul.u32 4, %s36
          %s1945 = ssub.s32 512, 512
          %1946 = vsyncadd %s1931, %s1945
          %s1947 = smul.addr %s1943, 128
          %s1948 = scalar_lea.hbm %s14, %s1947
          %s1949 = sshll.u32 %s1934, 4
          %s1950 = int_to_ptr.vmem [resolvable:$true] %s1949
          %1955 = dma.vmem_to_hbm [thread:$0]  %s1950, 512, %s1948, %s1931, 128, 128, 8
        $region96: #{tpu_custom_call.1} parent=75 // pred_fallthru
          _
        // Predicated region
        $region97: #{tpu_custom_call.1} parent=75 // pred_check
          %p1956 = pneg %p388
        $region98: #{tpu_custom_call.1} parent=75 // pred_check_branch
          %1958 = sbr.rel (%p1956) target = $region100
        $region99: #{tpu_custom_call.1} parent=75 // pred_region
          %s1959 = ssub.s32 1, %s36
          %s1960 = smul.u32 4, %s1959
          %s1962 = ssub.s32 512, 512
          %1963 = vsyncadd %s1936, %s1962
          %s1964 = smul.addr %s1960, 128
          %s1965 = scalar_lea.hbm %s15, %s1964
          %s1966 = sshll.u32 %s1939, 4
          %s1967 = int_to_ptr.vmem [resolvable:$true] %s1966
          %1972 = dma.vmem_to_hbm [thread:$0]  %s1967, 512, %s1965, %s1936, 128, 128, 8
        $region100: #{tpu_custom_call.1} parent=75 // pred_fallthru
          _
        // Predicated region
        $region101: #{tpu_custom_call.1} parent=75 // pred_check
          %p1973 = pneg %p409
        $region102: #{tpu_custom_call.1} parent=75 // pred_check_branch
          %1975 = sbr.rel (%p1973) target = $region104
        $region103: #{tpu_custom_call.1} parent=75 // pred_region
          %s1977 = ssub.s32 128, 128
          %1978 = vsyncadd [#allocation13], %s1977
          %s1980 = sshll.u32 [#allocation14], 4
          %s1981 = int_to_ptr.vmem [resolvable:$true] %s1980
          %1983 = dma.vmem_to_hbm [thread:$0]  %s1981, 128, %s16, [#allocation13]
        $region104: #{tpu_custom_call.1} parent=75 // pred_fallthru
          _
        // Predicated region
        $region105: #{tpu_custom_call.1} parent=75 // pred_check
          %p1984 = pneg %p409
        $region106: #{tpu_custom_call.1} parent=75 // pred_check_branch
          %1986 = sbr.rel (%p1984) target = $region108
        $region107: #{tpu_custom_call.1} parent=75 // pred_region
          %1987 = dma.done [#allocation13], 128
        $region108: #{tpu_custom_call.1} parent=75 // pred_fallthru
          _
      $region76: #{tpu_custom_call.1} parent=5 // pred_fallthru
        _
      %p1988 = scmp.le.s32.totalorder 2, %s31
      // Predicated region
      $region109: #{tpu_custom_call.1} parent=5 // pred_check
        %p1989 = pneg %p1988
      $region110: #{tpu_custom_call.1} parent=5 // pred_check_branch
        %1991 = sbr.rel (%p1989) target = $region112
      $region111: #{tpu_custom_call.1} parent=5 // pred_region
        %s1992 = ssub.s32 %s31, 2
        // Predicated region
        $region113: #{tpu_custom_call.1} parent=111 // pred_check
          %p1993 = pneg %p366
        $region114: #{tpu_custom_call.1} parent=111 // pred_check_branch
          %1995 = sbr.rel (%p1993) target = $region116
        $region115: #{tpu_custom_call.1} parent=111 // pred_region
          %s1996 = sand.u32 %s351, 1
          %s1997 = scalar_lea.sflag [#allocation8], %s1996
          %s1998 = sand.u32 %s351, 1
          %s1999 = smul.addr %s1998, 32
          %s2000 = scalar_lea.vmem [#allocation11], %s1999
          %2001 = dma.done %s1997, 512
        $region116: #{tpu_custom_call.1} parent=111 // pred_fallthru
          _
        // Predicated region
        $region117: #{tpu_custom_call.1} parent=111 // pred_check
          %p2002 = pneg %p394
        $region118: #{tpu_custom_call.1} parent=111 // pred_check_branch
          %2004 = sbr.rel (%p2002) target = $region120
        $region119: #{tpu_custom_call.1} parent=111 // pred_region
          %s2005 = sand.u32 %s37, 1
          %s2006 = scalar_lea.sflag [#allocation13], %s2005
          %s2007 = sand.u32 %s379, 1
          %s2008 = smul.addr %s2007, 32
          %s2009 = scalar_lea.vmem [#allocation12], %s2008
          %2010 = dma.done %s2006, 512
        $region120: #{tpu_custom_call.1} parent=111 // pred_fallthru
          _
      $region112: #{tpu_custom_call.1} parent=5 // pred_fallthru
        _
    $region6: #{tpu_custom_call.1} parent=1 // loop_footer
      %s35 = sadd.s32 1, %s31
    $region7: #{tpu_custom_call.1} parent=1 // loop_footer_branch
      %30 = sbr.rel target = $region3
    $region8: #{tpu_custom_call.1} parent=1 // loop_exit
      _
    %2011 = vsyncpa [#allocation7], 1
    %s2012 = scalar_lea.sflag [#allocation7], 1
    %2013 = vsyncpa %s2012, 1
    %2014 = vsyncpa [#allocation10], 1
    %2015 = vsyncpa [#allocation8], 1
    %s2016 = scalar_lea.sflag [#allocation8], 1
    %2017 = vsyncpa %s2016, 1
    %2018 = vsyncpa [#allocation13], 1
    %s2019 = scalar_lea.sflag [#allocation13], 1
    %2020 = vsyncpa %s2019, 1

</llo_original>
